<compile_context>
chip_gen: v7x
topology: tpu7x:2x2x1
jax: 0.10.0
libtpu: 0.0.40
codegen_flags: <defaults>
</compile_context>

<pallas_src>
import functools

import jax
import jax.numpy as jnp
from jax import lax
from jax.experimental import pallas as pl
from jax.experimental.pallas import tpu as pltpu


# Contract dim 1 of both operands: (out, in) x (TB, in) -> (out, TB).
_NT_DIMS = (((1,), (1,)), ((), ()))


def _leaky_relu(v):
    # mul + max = 2 VALU ops (vs cmp + mul + select = 3).
    return jnp.maximum(v, 0.01 * v)


def mlp_kernel(x_ref,
               w1_ref, b1_ref,
               w2_ref, b2_ref,
               w3_ref, b3_ref,
               w4_ref, b4_ref,
               o_ref, *, act_dtype):
    # x tile arrives batch-major (TB, 44) f32 straight from HBM; cast to bf16
    # here and let the MXU handle the layout flip via an NT matmul so every
    # intermediate is feature-major (features, TB) with batch on lanes.
    xb = x_ref[...].astype(jnp.bfloat16)                         # (TB, 44)

    # (128, 44) . (TB, 44)^T -> (128, TB), f32 accumulation on the MXU.
    h = lax.dot_general(w1_ref[...], xb, _NT_DIMS,
                        preferred_element_type=jnp.float32)
    h = _leaky_relu((h + b1_ref[...]).astype(act_dtype))

    # (64, 128) @ (128, TB) -> (64, TB)
    h = jnp.dot(w2_ref[...], h.astype(jnp.bfloat16),
                preferred_element_type=jnp.float32)
    h = _leaky_relu((h + b2_ref[...]).astype(act_dtype))

    # (32, 64) @ (64, TB) -> (32, TB)
    h = jnp.dot(w3_ref[...], h.astype(jnp.bfloat16),
                preferred_element_type=jnp.float32)
    h = _leaky_relu((h + b3_ref[...]).astype(act_dtype))

    # Final 32 -> 1 layer on the VPU/XLU: broadcast-multiply by the f32 weight
    # column (32, 1) and sublane-reduce -> lane-dense (1, TB) row (unmasked vst).
    out = jnp.sum(h.astype(jnp.float32) * w4_ref[...], axis=0, keepdims=True)
    o_ref[...] = (out + b4_ref[...]).astype(o_ref.dtype)


def _round_up(n, m):
    return ((n + m - 1) // m) * m


def _default_tile_b(batch):
    # 2048-4096 per tile amortizes per-grid-step overhead; keep it a multiple
    # of 512 (MXU N granularity / lane-dense output) and split the batch into
    # >=2 tiles when possible so both v7x TensorCores get work.
    t = _round_up(max(1, -(-batch // 2)), 512)
    return max(512, min(t, 4096))


def _use_bf16_activations():
    # bf16 VPU exists on v6e / v7x; keep f32 activations elsewhere (v5e etc.).
    try:
        kind = jax.devices()[0].device_kind.lower()
    except Exception:
        return False
    return any(tag in kind for tag in ("v6", "v7", "7x"))


def mlp_forward(x, params, *, tile_b=None, bf16_activations=None):
    """x: (B, 44) float32; params: PyTorch layout, w{i}: (out,in), b{i}: (out,1)."""
    B = x.shape[0]
    if tile_b is None:
        tile_b = _default_tile_b(B)
    if bf16_activations is None:
        bf16_activations = _use_bf16_activations()
    act_dtype = jnp.bfloat16 if bf16_activations else jnp.float32

    num_tiles = pl.cdiv(B, tile_b)
    b_pad = num_tiles * tile_b
    if b_pad != B:
        # Zero-padded tail rows are computed and sliced off afterwards.
        x = jnp.pad(x, ((0, b_pad - B), (0, 0)))

    w1 = params["w1"].astype(jnp.bfloat16)               # (128, 44)
    w2 = params["w2"].astype(jnp.bfloat16)               # (64, 128)
    w3 = params["w3"].astype(jnp.bfloat16)               # (32, 64)
    w4 = params["w4"].T                                  # (32, 1) f32, VPU tail
    b1, b2, b3, b4 = params["b1"], params["b2"], params["b3"], params["b4"]

    # Weights/biases: full-array blocks with constant index_map -> DMA'd once,
    # VMEM-resident across the whole grid.
    resident = lambda a: pl.BlockSpec(a.shape, lambda i: (0, 0))

    flops = 2 * b_pad * (44 * 128 + 128 * 64 + 64 * 32 + 32)
    bytes_accessed = int(
        b_pad * 44 * 4 + b_pad * 4
        + (w1.size + w2.size + w3.size) * 2
        + (w4.size + b1.size + b2.size + b3.size + b4.size) * 4)

    kernel = functools.partial(mlp_kernel, act_dtype=act_dtype)

    out = pl.pallas_call(
        kernel,
        out_shape=jax.ShapeDtypeStruct((1, b_pad), jnp.float32),
        grid=(num_tiles,),
        in_specs=[pl.BlockSpec((tile_b, 44), lambda i: (i, 0)),
                  resident(w1), resident(b1),
                  resident(w2), resident(b2),
                  resident(w3), resident(b3),
                  resident(w4), resident(b4)],
        out_specs=pl.BlockSpec((1, tile_b), lambda i: (0, i)),
        compiler_params=pltpu.CompilerParams(
            dimension_semantics=("parallel",)),
        cost_estimate=pl.CostEstimate(flops=flops, transcendentals=0,
                                      bytes_accessed=bytes_accessed),
    )(x, w1, b1, w2, b2, w3, b3, w4, b4)

    return out[0, :B].reshape(B, 1)


def init_params(key):
    """PyTorch nn.Linear default init: uniform(+-1/sqrt(fan_in)), weight (out,in)."""
    dims = [44, 128, 64, 32, 1]
    params = {}
    for i in range(4):
        fan_in, fan_out = dims[i], dims[i + 1]
        key, kw, kb = jax.random.split(key, 3)
        bound = 1.0 / (fan_in ** 0.5)
        params[f"w{i + 1}"] = jax.random.uniform(
            kw, (fan_out, fan_in), jnp.float32, -bound, bound)
        params[f"b{i + 1}"] = jax.random.uniform(
            kb, (fan_out, 1), jnp.float32, -bound, bound)
    return params


def reference_forward_f32(x, params):
    """Pure-f32 JAX reference (PyTorch semantics)."""
    h = x
    for i in range(1, 4):
        h = h @ params[f"w{i}"].T + params[f"b{i}"][:, 0]
        h = jnp.where(h > 0, h, 0.01 * h)
    return h @ params["w4"].T + params["b4"][:, 0]


def reference_forward_kernel_numerics(x, params, bf16_activations):
    """Reference mirroring the kernel's bf16-operand / f32-accumulate numerics."""
    act_dt = jnp.bfloat16 if bf16_activations else jnp.float32
    h = x.astype(jnp.bfloat16)
    for i in range(1, 4):
        w = params[f"w{i}"].astype(jnp.bfloat16)
        h = jnp.dot(h, w.T, preferred_element_type=jnp.float32) + params[f"b{i}"][:, 0]
        h = h.astype(act_dt)
        h = jnp.maximum(h, 0.01 * h)
        h = h.astype(jnp.bfloat16)
    return h.astype(jnp.float32) @ params["w4"].T + params["b4"][:, 0]


if __name__ == "__main__":
    key = jax.random.PRNGKey(0)
    key, kx = jax.random.split(key)

    B = 600  # not a multiple of the tile -> exercises padding and a 2-tile grid
    x = jax.random.normal(kx, (B, 44), jnp.float32)
    params = init_params(key)

    out = jax.jit(mlp_forward)(x, params)
    out = jax.block_until_ready(out)

    assert out.shape == (B, 1), out.shape

    bf16_act = _use_bf16_activations()
    ref_kernel = reference_forward_kernel_numerics(x, params, bf16_act)
    ref_f32 = reference_forward_f32(x, params)
    assert jnp.allclose(out, ref_kernel, atol=1e-2, rtol=1e-2), (
        float(jnp.max(jnp.abs(out - ref_kernel))))
    assert jnp.allclose(out, ref_f32, atol=5e-2, rtol=5e-2), (
        float(jnp.max(jnp.abs(out - ref_f32))))

    print("KERNEL_OK")
</pallas_src>

<mosaic_0001>
module attributes {stable_mosaic.version = 11 : i64} {
  func.func @mlp_kernel(%arg0: i32, %arg1: memref<512x44xf32, #tpu.memory_space<vmem>>, %arg2: memref<128x44xbf16, #tpu.memory_space<vmem>>, %arg3: memref<128x1xf32, #tpu.memory_space<vmem>>, %arg4: memref<64x128xbf16, #tpu.memory_space<vmem>>, %arg5: memref<64x1xf32, #tpu.memory_space<vmem>>, %arg6: memref<32x64xbf16, #tpu.memory_space<vmem>>, %arg7: memref<32x1xf32, #tpu.memory_space<vmem>>, %arg8: memref<32x1xf32, #tpu.memory_space<vmem>>, %arg9: memref<1x1xf32, #tpu.memory_space<vmem>>, %arg10: memref<1x512xf32, #tpu.memory_space<vmem>>) attributes {dimension_semantics = [#tpu.dimension_semantics<parallel>], iteration_bounds = array<i64: 2>, scalar_prefetch = 0 : i64, scratch_operands = 0 : i64, tpu.core_type = #tpu.core_type<tc>, window_params = [{transform_indices = @transform_0, window_bounds = array<i64: 512, 44>}, {pipeline_mode = #tpu.pipeline_mode<synchronous>, transform_indices = @transform_1, window_bounds = array<i64: 128, 44>}, {pipeline_mode = #tpu.pipeline_mode<synchronous>, transform_indices = @transform_2, window_bounds = array<i64: 128, 1>}, {pipeline_mode = #tpu.pipeline_mode<synchronous>, transform_indices = @transform_3, window_bounds = array<i64: 64, 128>}, {pipeline_mode = #tpu.pipeline_mode<synchronous>, transform_indices = @transform_4, window_bounds = array<i64: 64, 1>}, {pipeline_mode = #tpu.pipeline_mode<synchronous>, transform_indices = @transform_5, window_bounds = array<i64: 32, 64>}, {pipeline_mode = #tpu.pipeline_mode<synchronous>, transform_indices = @transform_6, window_bounds = array<i64: 32, 1>}, {pipeline_mode = #tpu.pipeline_mode<synchronous>, transform_indices = @transform_7, window_bounds = array<i64: 32, 1>}, {pipeline_mode = #tpu.pipeline_mode<synchronous>, transform_indices = @transform_8, window_bounds = array<i64: 1, 1>}, {transform_indices = @transform_9, window_bounds = array<i64: 1, 512>}]} {
    %c0 = arith.constant 0 : index
    %c0_0 = arith.constant 0 : index
    %0 = vector.load %arg1[%c0, %c0_0] : memref<512x44xf32, #tpu.memory_space<vmem>>, vector<512x44xf32>
    %1 = arith.truncf %0 : vector<512x44xf32> to vector<512x44xbf16>
    %c0_1 = arith.constant 0 : index
    %c0_2 = arith.constant 0 : index
    %2 = vector.load %arg2[%c0_1, %c0_2] : memref<128x44xbf16, #tpu.memory_space<vmem>>, vector<128x44xbf16>
    %cst = arith.constant dense<0.000000e+00> : vector<128x512xf32>
    %3 = tpu.matmul %2, %1, %cst {dimension_numbers = #tpu.dot_dimension_numbers<[1], [1], [0], [0], [0, 0, 1, 0], [], []>} : vector<128x44xbf16>, vector<512x44xbf16>, vector<128x512xf32> -> vector<128x512xf32>
    %c0_3 = arith.constant 0 : index
    %c0_4 = arith.constant 0 : index
    %4 = vector.load %arg3[%c0_3, %c0_4] : memref<128x1xf32, #tpu.memory_space<vmem>>, vector<128x1xf32>
    %5 = vector.broadcast %4 : vector<128x1xf32> to vector<128x512xf32>
    %6 = arith.addf %3, %5 : vector<128x512xf32>
    %cst_5 = arith.constant 0.00999999977 : f32
    %7 = vector.broadcast %cst_5 : f32 to vector<128x512xf32>
    %8 = arith.mulf %7, %6 : vector<128x512xf32>
    %9 = arith.maximumf %6, %8 : vector<128x512xf32>
    %c0_6 = arith.constant 0 : index
    %c0_7 = arith.constant 0 : index
    %10 = vector.load %arg4[%c0_6, %c0_7] : memref<64x128xbf16, #tpu.memory_space<vmem>>, vector<64x128xbf16>
    %11 = arith.truncf %9 : vector<128x512xf32> to vector<128x512xbf16>
    %cst_8 = arith.constant dense<0.000000e+00> : vector<64x512xf32>
    %12 = tpu.matmul %10, %11, %cst_8 {dimension_numbers = #tpu.dot_dimension_numbers<[1], [0], [0], [1], [0, 0, 1, 1], [], []>} : vector<64x128xbf16>, vector<128x512xbf16>, vector<64x512xf32> -> vector<64x512xf32>
    %c0_9 = arith.constant 0 : index
    %c0_10 = arith.constant 0 : index
    %13 = vector.load %arg5[%c0_9, %c0_10] : memref<64x1xf32, #tpu.memory_space<vmem>>, vector<64x1xf32>
    %14 = vector.broadcast %13 : vector<64x1xf32> to vector<64x512xf32>
    %15 = arith.addf %12, %14 : vector<64x512xf32>
    %cst_11 = arith.constant 0.00999999977 : f32
    %16 = vector.broadcast %cst_11 : f32 to vector<64x512xf32>
    %17 = arith.mulf %16, %15 : vector<64x512xf32>
    %18 = arith.maximumf %15, %17 : vector<64x512xf32>
    %c0_12 = arith.constant 0 : index
    %c0_13 = arith.constant 0 : index
    %19 = vector.load %arg6[%c0_12, %c0_13] : memref<32x64xbf16, #tpu.memory_space<vmem>>, vector<32x64xbf16>
    %20 = arith.truncf %18 : vector<64x512xf32> to vector<64x512xbf16>
    %cst_14 = arith.constant dense<0.000000e+00> : vector<32x512xf32>
    %21 = tpu.matmul %19, %20, %cst_14 {dimension_numbers = #tpu.dot_dimension_numbers<[1], [0], [0], [1], [0, 0, 1, 1], [], []>} : vector<32x64xbf16>, vector<64x512xbf16>, vector<32x512xf32> -> vector<32x512xf32>
    %c0_15 = arith.constant 0 : index
    %c0_16 = arith.constant 0 : index
    %22 = vector.load %arg7[%c0_15, %c0_16] : memref<32x1xf32, #tpu.memory_space<vmem>>, vector<32x1xf32>
    %23 = vector.broadcast %22 : vector<32x1xf32> to vector<32x512xf32>
    %24 = arith.addf %21, %23 : vector<32x512xf32>
    %cst_17 = arith.constant 0.00999999977 : f32
    %25 = vector.broadcast %cst_17 : f32 to vector<32x512xf32>
    %26 = arith.mulf %25, %24 : vector<32x512xf32>
    %27 = arith.maximumf %24, %26 : vector<32x512xf32>
    %c0_18 = arith.constant 0 : index
    %c0_19 = arith.constant 0 : index
    %28 = vector.load %arg8[%c0_18, %c0_19] : memref<32x1xf32, #tpu.memory_space<vmem>>, vector<32x1xf32>
    %29 = vector.broadcast %28 : vector<32x1xf32> to vector<32x512xf32>
    %30 = arith.mulf %27, %29 : vector<32x512xf32>
    %cst_20 = arith.constant dense<0.000000e+00> : vector<512xf32>
    %31 = vector.multi_reduction <add>, %30, %cst_20 [0] : vector<32x512xf32> to vector<512xf32>
    %32 = vector.shape_cast %31 : vector<512xf32> to vector<1x512xf32>
    %c0_21 = arith.constant 0 : index
    %c0_22 = arith.constant 0 : index
    %33 = vector.load %arg9[%c0_21, %c0_22] : memref<1x1xf32, #tpu.memory_space<vmem>>, vector<1x1xf32>
    %34 = vector.broadcast %33 : vector<1x1xf32> to vector<1x512xf32>
    %35 = arith.addf %32, %34 : vector<1x512xf32>
    %c0_23 = arith.constant 0 : index
    %c0_24 = arith.constant 0 : index
    %36 = vector.load %arg10[%c0_23, %c0_24] : memref<1x512xf32, #tpu.memory_space<vmem>>, vector<1x512xf32>
    tpu.vector_store %arg10[%c0_23, %c0_24], %35 {strides = array<i32>} : memref<1x512xf32, #tpu.memory_space<vmem>>, vector<1x512xf32>,
    return
  }
  func.func @transform_0(%arg0: i32) -> (i32, i32) {
    %c0_i32 = arith.constant 0 : i32
    %c0_i32_0 = arith.constant 0 : i32
    return %arg0, %c0_i32 : i32, i32
  }
  func.func @transform_1(%arg0: i32) -> (i32, i32) {
    %c0_i32 = arith.constant 0 : i32
    %c0_i32_0 = arith.constant 0 : i32
    %c0_i32_1 = arith.constant 0 : i32
    return %c0_i32, %c0_i32_0 : i32, i32
  }
  func.func @transform_2(%arg0: i32) -> (i32, i32) {
    %c0_i32 = arith.constant 0 : i32
    %c0_i32_0 = arith.constant 0 : i32
    %c0_i32_1 = arith.constant 0 : i32
    return %c0_i32, %c0_i32_0 : i32, i32
  }
  func.func @transform_3(%arg0: i32) -> (i32, i32) {
    %c0_i32 = arith.constant 0 : i32
    %c0_i32_0 = arith.constant 0 : i32
    %c0_i32_1 = arith.constant 0 : i32
    return %c0_i32, %c0_i32_0 : i32, i32
  }
  func.func @transform_4(%arg0: i32) -> (i32, i32) {
    %c0_i32 = arith.constant 0 : i32
    %c0_i32_0 = arith.constant 0 : i32
    %c0_i32_1 = arith.constant 0 : i32
    return %c0_i32, %c0_i32_0 : i32, i32
  }
  func.func @transform_5(%arg0: i32) -> (i32, i32) {
    %c0_i32 = arith.constant 0 : i32
    %c0_i32_0 = arith.constant 0 : i32
    %c0_i32_1 = arith.constant 0 : i32
    return %c0_i32, %c0_i32_0 : i32, i32
  }
  func.func @transform_6(%arg0: i32) -> (i32, i32) {
    %c0_i32 = arith.constant 0 : i32
    %c0_i32_0 = arith.constant 0 : i32
    %c0_i32_1 = arith.constant 0 : i32
    return %c0_i32, %c0_i32_0 : i32, i32
  }
  func.func @transform_7(%arg0: i32) -> (i32, i32) {
    %c0_i32 = arith.constant 0 : i32
    %c0_i32_0 = arith.constant 0 : i32
    %c0_i32_1 = arith.constant 0 : i32
    return %c0_i32, %c0_i32_0 : i32, i32
  }
  func.func @transform_8(%arg0: i32) -> (i32, i32) {
    %c0_i32 = arith.constant 0 : i32
    %c0_i32_0 = arith.constant 0 : i32
    %c0_i32_1 = arith.constant 0 : i32
    return %c0_i32, %c0_i32_0 : i32, i32
  }
  func.func @transform_9(%arg0: i32) -> (i32, i32) {
    %c0_i32 = arith.constant 0 : i32
    %c0_i32_0 = arith.constant 0 : i32
    return %c0_i32, %arg0 : i32, i32
  }
}

</mosaic_0001>

<llo_original>
// kernel: mlp_forward.1
$region0: #{mlp_forward.1}
  #allocation0 [shape = 'u32[]', space=smem, size = 0x4, offset = 0x4, fixed_abs, tag = 'smem constant byte address 0x4 - core index']
  #allocation1 [shape = 'u32[144,128]{1,0:T(1,128)}', space=vmem, size = 0x12000, scoped, tag = 'internal scratch']
  #allocation2 [shape = 'f32[1,1]{1,0:T(1,128)S(1)}', space=vmem, size = 0x200, scoped, tag = 'scoped memory for mlp_forward.1']
  %s0 = inlined_call_operand.vmem [shape: f32[1024,44], index: 0, kind: input, shape index: {}]
  %s1 = inlined_call_operand.vmem [shape: bf16[128,44], index: 1, kind: input, shape index: {}]
  %s2 = inlined_call_operand.vmem [shape: f32[128,1], index: 2, kind: input, shape index: {}]
  %s3 = inlined_call_operand.vmem [shape: bf16[64,128], index: 3, kind: input, shape index: {}]
  %s4 = inlined_call_operand.vmem [shape: f32[64,1], index: 4, kind: input, shape index: {}]
  %s5 = inlined_call_operand.vmem [shape: bf16[32,64], index: 5, kind: input, shape index: {}]
  %s6 = inlined_call_operand.vmem [shape: f32[32,1], index: 6, kind: input, shape index: {}]
  %s7 = inlined_call_operand.vmem [shape: f32[32,1], index: 7, kind: input, shape index: {}]
  %s8 = inlined_call_operand.<no memory space> [shape: f32[1,1], index: 8, kind: input, shape index: {}]
  %s9 = inlined_call_operand.vmem [shape: f32[1,1024], index: 9, kind: output, shape index: {}]
  %s10 = sld [smem:[#allocation0]]
  $region69: #{mlp_forward.1} parent=0
    _
  %s12 = ssub.s32 1, %s10
  %s13 = scalar_select 0, %s12, %s10
  %v14 = vstv %s8
  %15 = vst [vmem:[#allocation2] sm:$0x1] %v14
  loop: start=0, step=1, limit=4
  $region2: #{mlp_forward.1} parent=0 // loop_pre_header
    _
  $region3: #{mlp_forward.1} parent=0 // loop_header
    %s17 = sphi 0, %s21
    %p18 = scmp.ge.s32.totalorder %s17, 4
    %s27 = sphi 0, %s29
    %s30 = sphi 0, %s27
    %s31 = sphi 0, %s30
    %s47 = sphi 0, %s31
    %s51 = sphi 0, %s51
    %s53 = sphi 0, %s51
    %s54 = sphi 0, %s53
    %s68 = sphi 0, %s54
    %s72 = sphi 0, %s72
    %s74 = sphi 0, %s72
    %s75 = sphi 0, %s74
    %s89 = sphi 0, %s75
    %s93 = sphi 0, %s93
    %s95 = sphi 0, %s93
    %s96 = sphi 0, %s95
    %s110 = sphi 0, %s96
    %s114 = sphi 0, %s114
    %s116 = sphi 0, %s114
    %s117 = sphi 0, %s116
    %s131 = sphi 0, %s117
    %s135 = sphi 0, %s135
    %s137 = sphi 0, %s135
    %s138 = sphi 0, %s137
    %s152 = sphi 0, %s138
    %s156 = sphi 0, %s156
    %s158 = sphi 0, %s156
    %s159 = sphi 0, %s158
    %s173 = sphi 0, %s159
    %s177 = sphi 0, %s177
    %s179 = sphi 0, %s177
    %s180 = sphi 0, %s179
    %s194 = sphi 0, %s180
    %s198 = sphi 0, %s198
    %s200 = sphi 0, %s198
    %s201 = sphi 0, %s200
    %s215 = sphi 0, %s201
    %s221 = sphi 0, %s223
    %s224 = sphi 0, %s221
    %s225 = sphi 0, %s224
    %s241 = sphi 0, %s225
  $region4: #{mlp_forward.1} parent=0 // loop_header_branch
    %20 = sbr.rel (%p18) target = $region8
  $region5: #{mlp_forward.1} parent=0 // loop_body
    %s22 = ssub.s32 %s17, 1
    %s23 = ssub.s32 %s17, 2
    %s24 = sadd.s32 %s17, 1
    %s25 = ssub.s32 %s17, %s24
    %p26 = scmp.eq.s32.totalorder %s25, 0
    %s28 = sadd.s32 %s27, 1
    %s29 = scalar_select %p26, %s27, %s28
    %p32 = pneg %p26
    %p33 = scmp.eq.s32.totalorder %s17, 1
    %p34 = por %p32, %p33
    %p35 = scmp.ne.s32.totalorder %s27, %s30
    %p36 = scmp.eq.s32.totalorder %s17, 0
    %p37 = por %p35, %p36
    %p38 = scmp.ne.s32.totalorder %s27, %s30
    %p39 = scmp.eq.s32.totalorder %s22, 1
    %p40 = por %p38, %p39
    %p41 = scmp.ne.s32.totalorder %s30, %s31
    %p42 = scmp.eq.s32.totalorder %s22, 0
    %p43 = por %p41, %p42
    %p44 = scmp.ne.s32.totalorder %s30, %s31
    %p45 = scmp.eq.s32.totalorder %s23, 1
    %p46 = por %p44, %p45
    %p48 = scmp.ne.s32.totalorder %s31, %s47
    %p49 = scmp.eq.s32.totalorder %s23, 0
    %p50 = por %p48, %p49
    %s52 = sadd.s32 %s51, 1
    %p55 = scmp.eq.s32.totalorder %s17, 1
    %p56 = scmp.ne.s32.totalorder %s51, %s53
    %p57 = scmp.eq.s32.totalorder %s17, 0
    %p58 = por %p56, %p57
    %p59 = scmp.ne.s32.totalorder %s51, %s53
    %p60 = scmp.eq.s32.totalorder %s22, 1
    %p61 = por %p59, %p60
    %p62 = scmp.ne.s32.totalorder %s53, %s54
    %p63 = scmp.eq.s32.totalorder %s22, 0
    %p64 = por %p62, %p63
    %p65 = scmp.ne.s32.totalorder %s53, %s54
    %p66 = scmp.eq.s32.totalorder %s23, 1
    %p67 = por %p65, %p66
    %p69 = scmp.ne.s32.totalorder %s54, %s68
    %p70 = scmp.eq.s32.totalorder %s23, 0
    %p71 = por %p69, %p70
    %s73 = sadd.s32 %s72, 1
    %p76 = scmp.eq.s32.totalorder %s17, 1
    %p77 = scmp.ne.s32.totalorder %s72, %s74
    %p78 = scmp.eq.s32.totalorder %s17, 0
    %p79 = por %p77, %p78
    %p80 = scmp.ne.s32.totalorder %s72, %s74
    %p81 = scmp.eq.s32.totalorder %s22, 1
    %p82 = por %p80, %p81
    %p83 = scmp.ne.s32.totalorder %s74, %s75
    %p84 = scmp.eq.s32.totalorder %s22, 0
    %p85 = por %p83, %p84
    %p86 = scmp.ne.s32.totalorder %s74, %s75
    %p87 = scmp.eq.s32.totalorder %s23, 1
    %p88 = por %p86, %p87
    %p90 = scmp.ne.s32.totalorder %s75, %s89
    %p91 = scmp.eq.s32.totalorder %s23, 0
    %p92 = por %p90, %p91
    %s94 = sadd.s32 %s93, 1
    %p97 = scmp.eq.s32.totalorder %s17, 1
    %p98 = scmp.ne.s32.totalorder %s93, %s95
    %p99 = scmp.eq.s32.totalorder %s17, 0
    %p100 = por %p98, %p99
    %p101 = scmp.ne.s32.totalorder %s93, %s95
    %p102 = scmp.eq.s32.totalorder %s22, 1
    %p103 = por %p101, %p102
    %p104 = scmp.ne.s32.totalorder %s95, %s96
    %p105 = scmp.eq.s32.totalorder %s22, 0
    %p106 = por %p104, %p105
    %p107 = scmp.ne.s32.totalorder %s95, %s96
    %p108 = scmp.eq.s32.totalorder %s23, 1
    %p109 = por %p107, %p108
    %p111 = scmp.ne.s32.totalorder %s96, %s110
    %p112 = scmp.eq.s32.totalorder %s23, 0
    %p113 = por %p111, %p112
    %s115 = sadd.s32 %s114, 1
    %p118 = scmp.eq.s32.totalorder %s17, 1
    %p119 = scmp.ne.s32.totalorder %s114, %s116
    %p120 = scmp.eq.s32.totalorder %s17, 0
    %p121 = por %p119, %p120
    %p122 = scmp.ne.s32.totalorder %s114, %s116
    %p123 = scmp.eq.s32.totalorder %s22, 1
    %p124 = por %p122, %p123
    %p125 = scmp.ne.s32.totalorder %s116, %s117
    %p126 = scmp.eq.s32.totalorder %s22, 0
    %p127 = por %p125, %p126
    %p128 = scmp.ne.s32.totalorder %s116, %s117
    %p129 = scmp.eq.s32.totalorder %s23, 1
    %p130 = por %p128, %p129
    %p132 = scmp.ne.s32.totalorder %s117, %s131
    %p133 = scmp.eq.s32.totalorder %s23, 0
    %p134 = por %p132, %p133
    %s136 = sadd.s32 %s135, 1
    %p139 = scmp.eq.s32.totalorder %s17, 1
    %p140 = scmp.ne.s32.totalorder %s135, %s137
    %p141 = scmp.eq.s32.totalorder %s17, 0
    %p142 = por %p140, %p141
    %p143 = scmp.ne.s32.totalorder %s135, %s137
    %p144 = scmp.eq.s32.totalorder %s22, 1
    %p145 = por %p143, %p144
    %p146 = scmp.ne.s32.totalorder %s137, %s138
    %p147 = scmp.eq.s32.totalorder %s22, 0
    %p148 = por %p146, %p147
    %p149 = scmp.ne.s32.totalorder %s137, %s138
    %p150 = scmp.eq.s32.totalorder %s23, 1
    %p151 = por %p149, %p150
    %p153 = scmp.ne.s32.totalorder %s138, %s152
    %p154 = scmp.eq.s32.totalorder %s23, 0
    %p155 = por %p153, %p154
    %s157 = sadd.s32 %s156, 1
    %p160 = scmp.eq.s32.totalorder %s17, 1
    %p161 = scmp.ne.s32.totalorder %s156, %s158
    %p162 = scmp.eq.s32.totalorder %s17, 0
    %p163 = por %p161, %p162
    %p164 = scmp.ne.s32.totalorder %s156, %s158
    %p165 = scmp.eq.s32.totalorder %s22, 1
    %p166 = por %p164, %p165
    %p167 = scmp.ne.s32.totalorder %s158, %s159
    %p168 = scmp.eq.s32.totalorder %s22, 0
    %p169 = por %p167, %p168
    %p170 = scmp.ne.s32.totalorder %s158, %s159
    %p171 = scmp.eq.s32.totalorder %s23, 1
    %p172 = por %p170, %p171
    %p174 = scmp.ne.s32.totalorder %s159, %s173
    %p175 = scmp.eq.s32.totalorder %s23, 0
    %p176 = por %p174, %p175
    %s178 = sadd.s32 %s177, 1
    %p181 = scmp.eq.s32.totalorder %s17, 1
    %p182 = scmp.ne.s32.totalorder %s177, %s179
    %p183 = scmp.eq.s32.totalorder %s17, 0
    %p184 = por %p182, %p183
    %p185 = scmp.ne.s32.totalorder %s177, %s179
    %p186 = scmp.eq.s32.totalorder %s22, 1
    %p187 = por %p185, %p186
    %p188 = scmp.ne.s32.totalorder %s179, %s180
    %p189 = scmp.eq.s32.totalorder %s22, 0
    %p190 = por %p188, %p189
    %p191 = scmp.ne.s32.totalorder %s179, %s180
    %p192 = scmp.eq.s32.totalorder %s23, 1
    %p193 = por %p191, %p192
    %p195 = scmp.ne.s32.totalorder %s180, %s194
    %p196 = scmp.eq.s32.totalorder %s23, 0
    %p197 = por %p195, %p196
    %s199 = sadd.s32 %s198, 1
    %p202 = scmp.eq.s32.totalorder %s17, 1
    %p203 = scmp.ne.s32.totalorder %s198, %s200
    %p204 = scmp.eq.s32.totalorder %s17, 0
    %p205 = por %p203, %p204
    %p206 = scmp.ne.s32.totalorder %s198, %s200
    %p207 = scmp.eq.s32.totalorder %s22, 1
    %p208 = por %p206, %p207
    %p209 = scmp.ne.s32.totalorder %s200, %s201
    %p210 = scmp.eq.s32.totalorder %s22, 0
    %p211 = por %p209, %p210
    %p212 = scmp.ne.s32.totalorder %s200, %s201
    %p213 = scmp.eq.s32.totalorder %s23, 1
    %p214 = por %p212, %p213
    %p216 = scmp.ne.s32.totalorder %s201, %s215
    %p217 = scmp.eq.s32.totalorder %s23, 0
    %p218 = por %p216, %p217
    %s219 = ssub.s32 %s17, %s24
    %p220 = scmp.eq.s32.totalorder %s219, 0
    %s222 = sadd.s32 %s221, 1
    %s223 = scalar_select %p220, %s221, %s222
    %p226 = pneg %p220
    %p227 = scmp.eq.s32.totalorder %s17, 1
    %p228 = por %p226, %p227
    %p229 = scmp.ne.s32.totalorder %s221, %s224
    %p230 = scmp.eq.s32.totalorder %s17, 0
    %p231 = por %p229, %p230
    %p232 = scmp.ne.s32.totalorder %s221, %s224
    %p233 = scmp.eq.s32.totalorder %s22, 1
    %p234 = por %p232, %p233
    %p235 = scmp.ne.s32.totalorder %s224, %s225
    %p236 = scmp.eq.s32.totalorder %s22, 0
    %p237 = por %p235, %p236
    %p238 = scmp.ne.s32.totalorder %s224, %s225
    %p239 = scmp.eq.s32.totalorder %s23, 1
    %p240 = por %p238, %p239
    %p242 = scmp.ne.s32.totalorder %s225, %s241
    %p243 = scmp.eq.s32.totalorder %s23, 0
    %p244 = por %p242, %p243
    %p245 = scmp.le.s32.totalorder 1, %s17
    %p246 = scmp.lt.s32.totalorder %s17, 3
    %p247 = pnand %p245, %p246
    %p248 = pneg %p247
    // Predicated region
    $region9: #{mlp_forward.1} parent=5 // pred_check
      _
    $region10: #{mlp_forward.1} parent=5 // pred_check_branch
      %250 = sbr.rel (%p247) target = $region12
    $region11: #{mlp_forward.1} parent=5 // pred_region
      %s251 = ssub.s32 %s17, 1
      // Predicated region
      $region13: #{mlp_forward.1} parent=11 // pred_check
        %p252 = pneg %p64
      $region14: #{mlp_forward.1} parent=11 // pred_check_branch
        %254 = sbr.rel (%p252) target = $region16
      $region15: #{mlp_forward.1} parent=11 // pred_region
        _
      $region16: #{mlp_forward.1} parent=11 // pred_fallthru
        _
      // Predicated region
      $region17: #{mlp_forward.1} parent=11 // pred_check
        %p255 = pneg %p85
      $region18: #{mlp_forward.1} parent=11 // pred_check_branch
        %257 = sbr.rel (%p255) target = $region20
      $region19: #{mlp_forward.1} parent=11 // pred_region
        _
      $region20: #{mlp_forward.1} parent=11 // pred_fallthru
        _
      // Predicated region
      $region21: #{mlp_forward.1} parent=11 // pred_check
        %p258 = pneg %p106
      $region22: #{mlp_forward.1} parent=11 // pred_check_branch
        %260 = sbr.rel (%p258) target = $region24
      $region23: #{mlp_forward.1} parent=11 // pred_region
        _
      $region24: #{mlp_forward.1} parent=11 // pred_fallthru
        _
      // Predicated region
      $region25: #{mlp_forward.1} parent=11 // pred_check
        %p261 = pneg %p127
      $region26: #{mlp_forward.1} parent=11 // pred_check_branch
        %263 = sbr.rel (%p261) target = $region28
      $region27: #{mlp_forward.1} parent=11 // pred_region
        _
      $region28: #{mlp_forward.1} parent=11 // pred_fallthru
        _
      // Predicated region
      $region29: #{mlp_forward.1} parent=11 // pred_check
        %p264 = pneg %p148
      $region30: #{mlp_forward.1} parent=11 // pred_check_branch
        %266 = sbr.rel (%p264) target = $region32
      $region31: #{mlp_forward.1} parent=11 // pred_region
        _
      $region32: #{mlp_forward.1} parent=11 // pred_fallthru
        _
      // Predicated region
      $region33: #{mlp_forward.1} parent=11 // pred_check
        %p267 = pneg %p169
      $region34: #{mlp_forward.1} parent=11 // pred_check_branch
        %269 = sbr.rel (%p267) target = $region36
      $region35: #{mlp_forward.1} parent=11 // pred_region
        _
      $region36: #{mlp_forward.1} parent=11 // pred_fallthru
        _
      // Predicated region
      $region37: #{mlp_forward.1} parent=11 // pred_check
        %p270 = pneg %p190
      $region38: #{mlp_forward.1} parent=11 // pred_check_branch
        %272 = sbr.rel (%p270) target = $region40
      $region39: #{mlp_forward.1} parent=11 // pred_region
        _
      $region40: #{mlp_forward.1} parent=11 // pred_fallthru
        _
      // Predicated region
      $region41: #{mlp_forward.1} parent=11 // pred_check
        %p273 = pneg %p211
      $region42: #{mlp_forward.1} parent=11 // pred_check_branch
        %275 = sbr.rel (%p273) target = $region44
      $region43: #{mlp_forward.1} parent=11 // pred_region
        _
      $region44: #{mlp_forward.1} parent=11 // pred_fallthru
        _
    $region12: #{mlp_forward.1} parent=5 // pred_fallthru
      _
    %p276 = scmp.lt.s32.totalorder %s17, 2
    // Predicated region
    $region45: #{mlp_forward.1} parent=5 // pred_check
      %p277 = pneg %p276
    $region46: #{mlp_forward.1} parent=5 // pred_check_branch
      %279 = sbr.rel (%p277) target = $region48
    $region47: #{mlp_forward.1} parent=5 // pred_region
      // Predicated region
      $region49: #{mlp_forward.1} parent=47 // pred_check
        %p280 = pneg %p37
      $region50: #{mlp_forward.1} parent=47 // pred_check_branch
        %282 = sbr.rel (%p280) target = $region52
      $region51: #{mlp_forward.1} parent=47 // pred_region
        %s283 = smul.u32 64, %s17
        %p284 = scmp.lt.s32.totalorder %s283, 127
        %s285 = scalar_select %p284, %s283, 127
        %s286 = smul.addr %s285, 8
        %s287 = scalar_lea.vmem %s0, %s286
        %s288 = smul.u32 64, %s17
      $region52: #{mlp_forward.1} parent=47 // pred_fallthru
        _
    $region48: #{mlp_forward.1} parent=5 // pred_fallthru
      _
    %p289 = scmp.le.s32.totalorder 1, %s17
    %p290 = scmp.lt.s32.totalorder %s17, 3
    %p291 = pnand %p289, %p290
    %p292 = pneg %p291
    // Predicated region
    $region53: #{mlp_forward.1} parent=5 // pred_check
      _
    $region54: #{mlp_forward.1} parent=5 // pred_check_branch
      %294 = sbr.rel (%p291) target = $region56
    $region55: #{mlp_forward.1} parent=5 // pred_region
      %s295 = ssub.s32 %s17, 1
      %s296 = smul.u32 64, %s22
      %p297 = scmp.lt.s32.totalorder %s296, 127
      %s298 = scalar_select %p297, %s296, 127
      %s299 = smul.addr %s298, 8
      %s300 = scalar_lea.vmem %s0, %s299
      %p301 = pneg %p43
      %p302 = pneg %p40
      %p303 = pneg %p64
      %p304 = pneg %p61
      %p305 = pneg %p85
      %p306 = pneg %p82
      %p307 = pneg %p106
      %p308 = pneg %p103
      %p309 = pneg %p127
      %p310 = pneg %p124
      %p311 = pneg %p148
      %p312 = pneg %p145
      %p313 = pneg %p169
      %p314 = pneg %p166
      %p315 = pneg %p190
      %p316 = pneg %p187
      %p317 = pneg %p211
      %p318 = pneg %p208
      %p319 = pneg %p237
      %p320 = pneg %p234
      %s321 = smul.u32 4, %s22
      %p322 = scmp.lt.s32.totalorder %s321, 7
      %s323 = scalar_select %p322, %s321, 7
      %s324 = scalar_lea.vmem %s9, %s323
      %s325 = smul.u32 64, %s22
      %p326 = scmp.lt.s32.totalorder %s325, 127
      %s327 = scalar_select %p326, %s325, 127
      %s328 = smul.addr %s327, 8
      %s329 = scalar_lea.vmem %s0, %s328
      %s330 = smul.u32 64, %s22
      %s331 = smul.u32 4, %s22
      %p332 = scmp.lt.s32.totalorder %s331, 7
      %s333 = scalar_select %p332, %s331, 7
      %s334 = scalar_lea.vmem %s9, %s333
      %s335 = smul.u32 4, %s22
      %v337 = vld [vmem:[%s329] sm:$0xff]
      %v338 = vld [vmem:[%s329 + $0x8] sm:$0xff]
      %v339 = vld [vmem:[%s329 + $0x10] sm:$0xff]
      %v340 = vld [vmem:[%s329 + $0x18] sm:$0xff]
      %v341 = vld [vmem:[%s329 + $0x20] sm:$0xff]
      %v342 = vld [vmem:[%s329 + $0x28] sm:$0xff]
      %v343 = vld [vmem:[%s329 + $0x30] sm:$0xff]
      %v344 = vld [vmem:[%s329 + $0x38] sm:$0xff]
      %v345 = vld [vmem:[%s329 + $0x40] sm:$0xff]
      %v346 = vld [vmem:[%s329 + $0x48] sm:$0xff]
      %v347 = vld [vmem:[%s329 + $0x50] sm:$0xff]
      %v348 = vld [vmem:[%s329 + $0x58] sm:$0xff]
      %v349 = vld [vmem:[%s329 + $0x60] sm:$0xff]
      %v350 = vld [vmem:[%s329 + $0x68] sm:$0xff]
      %v351 = vld [vmem:[%s329 + $0x70] sm:$0xff]
      %v352 = vld [vmem:[%s329 + $0x78] sm:$0xff]
      %v353 = vld [vmem:[%s329 + $0x80] sm:$0xff]
      %v354 = vld [vmem:[%s329 + $0x88] sm:$0xff]
      %v355 = vld [vmem:[%s329 + $0x90] sm:$0xff]
      %v356 = vld [vmem:[%s329 + $0x98] sm:$0xff]
      %v357 = vld [vmem:[%s329 + $0xa0] sm:$0xff]
      %v358 = vld [vmem:[%s329 + $0xa8] sm:$0xff]
      %v359 = vld [vmem:[%s329 + $0xb0] sm:$0xff]
      %v360 = vld [vmem:[%s329 + $0xb8] sm:$0xff]
      %v361 = vld [vmem:[%s329 + $0xc0] sm:$0xff]
      %v362 = vld [vmem:[%s329 + $0xc8] sm:$0xff]
      %v363 = vld [vmem:[%s329 + $0xd0] sm:$0xff]
      %v364 = vld [vmem:[%s329 + $0xd8] sm:$0xff]
      %v365 = vld [vmem:[%s329 + $0xe0] sm:$0xff]
      %v366 = vld [vmem:[%s329 + $0xe8] sm:$0xff]
      %v367 = vld [vmem:[%s329 + $0xf0] sm:$0xff]
      %v368 = vld [vmem:[%s329 + $0xf8] sm:$0xff]
      %v369 = vld [vmem:[%s329 + $0x100] sm:$0xff]
      %v370 = vld [vmem:[%s329 + $0x108] sm:$0xff]
      %v371 = vld [vmem:[%s329 + $0x110] sm:$0xff]
      %v372 = vld [vmem:[%s329 + $0x118] sm:$0xff]
      %v373 = vld [vmem:[%s329 + $0x120] sm:$0xff]
      %v374 = vld [vmem:[%s329 + $0x128] sm:$0xff]
      %v375 = vld [vmem:[%s329 + $0x130] sm:$0xff]
      %v376 = vld [vmem:[%s329 + $0x138] sm:$0xff]
      %v377 = vld [vmem:[%s329 + $0x140] sm:$0xff]
      %v378 = vld [vmem:[%s329 + $0x148] sm:$0xff]
      %v379 = vld [vmem:[%s329 + $0x150] sm:$0xff]
      %v380 = vld [vmem:[%s329 + $0x158] sm:$0xff]
      %v381 = vld [vmem:[%s329 + $0x160] sm:$0xff]
      %v382 = vld [vmem:[%s329 + $0x168] sm:$0xff]
      %v383 = vld [vmem:[%s329 + $0x170] sm:$0xff]
      %v384 = vld [vmem:[%s329 + $0x178] sm:$0xff]
      %v385 = vld [vmem:[%s329 + $0x180] sm:$0xff]
      %v386 = vld [vmem:[%s329 + $0x188] sm:$0xff]
      %v387 = vld [vmem:[%s329 + $0x190] sm:$0xff]
      %v388 = vld [vmem:[%s329 + $0x198] sm:$0xff]
      %v389 = vld [vmem:[%s329 + $0x1a0] sm:$0xff]
      %v390 = vld [vmem:[%s329 + $0x1a8] sm:$0xff]
      %v391 = vld [vmem:[%s329 + $0x1b0] sm:$0xff]
      %v392 = vld [vmem:[%s329 + $0x1b8] sm:$0xff]
      %v393 = vld [vmem:[%s329 + $0x1c0] sm:$0xff]
      %v394 = vld [vmem:[%s329 + $0x1c8] sm:$0xff]
      %v395 = vld [vmem:[%s329 + $0x1d0] sm:$0xff]
      %v396 = vld [vmem:[%s329 + $0x1d8] sm:$0xff]
      %v397 = vld [vmem:[%s329 + $0x1e0] sm:$0xff]
      %v398 = vld [vmem:[%s329 + $0x1e8] sm:$0xff]
      %v399 = vld [vmem:[%s329 + $0x1f0] sm:$0xff]
      %v400 = vld [vmem:[%s329 + $0x1f8] sm:$0xff]
      %v401 = vpack.c.bf16 %v338, %v337
      %v402 = vpack.c.bf16 %v340, %v339
      %v403 = vpack.c.bf16 %v342, %v341
      %v404 = vpack.c.bf16 %v344, %v343
      %v405 = vpack.c.bf16 %v346, %v345
      %v406 = vpack.c.bf16 %v348, %v347
      %v407 = vpack.c.bf16 %v350, %v349
      %v408 = vpack.c.bf16 %v352, %v351
      %v409 = vpack.c.bf16 %v354, %v353
      %v410 = vpack.c.bf16 %v356, %v355
      %v411 = vpack.c.bf16 %v358, %v357
      %v412 = vpack.c.bf16 %v360, %v359
      %v413 = vpack.c.bf16 %v362, %v361
      %v414 = vpack.c.bf16 %v364, %v363
      %v415 = vpack.c.bf16 %v366, %v365
      %v416 = vpack.c.bf16 %v368, %v367
      %v417 = vpack.c.bf16 %v370, %v369
      %v418 = vpack.c.bf16 %v372, %v371
      %v419 = vpack.c.bf16 %v374, %v373
      %v420 = vpack.c.bf16 %v376, %v375
      %v421 = vpack.c.bf16 %v378, %v377
      %v422 = vpack.c.bf16 %v380, %v379
      %v423 = vpack.c.bf16 %v382, %v381
      %v424 = vpack.c.bf16 %v384, %v383
      %v425 = vpack.c.bf16 %v386, %v385
      %v426 = vpack.c.bf16 %v388, %v387
      %v427 = vpack.c.bf16 %v390, %v389
      %v428 = vpack.c.bf16 %v392, %v391
      %v429 = vpack.c.bf16 %v394, %v393
      %v430 = vpack.c.bf16 %v396, %v395
      %v431 = vpack.c.bf16 %v398, %v397
      %v432 = vpack.c.bf16 %v400, %v399
      %v433 = vld [vmem:[%s1] sm:$0xf]
      %v434 = vld [vmem:[%s1 + $0x4] sm:$0xf]
      %v435 = vld [vmem:[%s1 + $0x8] sm:$0xf]
      %v436 = vld [vmem:[%s1 + $0xc] sm:$0xf]
      %v437 = vld [vmem:[%s1 + $0x10] sm:$0xf]
      %v438 = vld [vmem:[%s1 + $0x14] sm:$0xf]
      %v439 = vld [vmem:[%s1 + $0x18] sm:$0xf]
      %v440 = vld [vmem:[%s1 + $0x1c] sm:$0xf]
      %v441 = vld [vmem:[%s1 + $0x20] sm:$0xf]
      %v442 = vld [vmem:[%s1 + $0x24] sm:$0xf]
      %v443 = vld [vmem:[%s1 + $0x28] sm:$0xf]
      %v444 = vld [vmem:[%s1 + $0x2c] sm:$0xf]
      %v445 = vld [vmem:[%s1 + $0x30] sm:$0xf]
      %v446 = vld [vmem:[%s1 + $0x34] sm:$0xf]
      %v447 = vld [vmem:[%s1 + $0x38] sm:$0xf]
      %v448 = vld [vmem:[%s1 + $0x3c] sm:$0xf]
      %v449 = vld [vmem:[%s2] sm:$0xff]
      %v450 = vld [vmem:[%s2 + $0x8] sm:$0xff]
      %v451 = vld [vmem:[%s2 + $0x10] sm:$0xff]
      %v452 = vld [vmem:[%s2 + $0x18] sm:$0xff]
      %v453 = vld [vmem:[%s2 + $0x20] sm:$0xff]
      %v454 = vld [vmem:[%s2 + $0x28] sm:$0xff]
      %v455 = vld [vmem:[%s2 + $0x30] sm:$0xff]
      %v456 = vld [vmem:[%s2 + $0x38] sm:$0xff]
      %v457 = vld [vmem:[%s2 + $0x40] sm:$0xff]
      %v458 = vld [vmem:[%s2 + $0x48] sm:$0xff]
      %v459 = vld [vmem:[%s2 + $0x50] sm:$0xff]
      %v460 = vld [vmem:[%s2 + $0x58] sm:$0xff]
      %v461 = vld [vmem:[%s2 + $0x60] sm:$0xff]
      %v462 = vld [vmem:[%s2 + $0x68] sm:$0xff]
      %v463 = vld [vmem:[%s2 + $0x70] sm:$0xff]
      %v464 = vld [vmem:[%s2 + $0x78] sm:$0xff]
      %466 = vset.pattern.permute.xlu0 0
      %467 = vperm.xlu0 %466, %v449
      %v468 = vpop.permute.xlu0 %467
      %471 = vset.pattern.permute.xlu0 0
      %472 = vperm.xlu0 %471, %v450
      %v473 = vpop.permute.xlu0 %472
      %476 = vset.pattern.permute.xlu0 0
      %477 = vperm.xlu0 %476, %v451
      %v478 = vpop.permute.xlu0 %477
      %481 = vset.pattern.permute.xlu0 0
      %482 = vperm.xlu0 %481, %v452
      %v483 = vpop.permute.xlu0 %482
      %486 = vset.pattern.permute.xlu0 0
      %487 = vperm.xlu0 %486, %v453
      %v488 = vpop.permute.xlu0 %487
      %491 = vset.pattern.permute.xlu0 0
      %492 = vperm.xlu0 %491, %v454
      %v493 = vpop.permute.xlu0 %492
      %496 = vset.pattern.permute.xlu0 0
      %497 = vperm.xlu0 %496, %v455
      %v498 = vpop.permute.xlu0 %497
      %501 = vset.pattern.permute.xlu0 0
      %502 = vperm.xlu0 %501, %v456
      %v503 = vpop.permute.xlu0 %502
      %506 = vset.pattern.permute.xlu0 0
      %507 = vperm.xlu0 %506, %v457
      %v508 = vpop.permute.xlu0 %507
      %511 = vset.pattern.permute.xlu0 0
      %512 = vperm.xlu0 %511, %v458
      %v513 = vpop.permute.xlu0 %512
      %516 = vset.pattern.permute.xlu0 0
      %517 = vperm.xlu0 %516, %v459
      %v518 = vpop.permute.xlu0 %517
      %521 = vset.pattern.permute.xlu0 0
      %522 = vperm.xlu0 %521, %v460
      %v523 = vpop.permute.xlu0 %522
      %526 = vset.pattern.permute.xlu0 0
      %527 = vperm.xlu0 %526, %v461
      %v528 = vpop.permute.xlu0 %527
      %531 = vset.pattern.permute.xlu0 0
      %532 = vperm.xlu0 %531, %v462
      %v533 = vpop.permute.xlu0 %532
      %536 = vset.pattern.permute.xlu0 0
      %537 = vperm.xlu0 %536, %v463
      %v538 = vpop.permute.xlu0 %537
      %541 = vset.pattern.permute.xlu0 0
      %542 = vperm.xlu0 %541, %v464
      %v543 = vpop.permute.xlu0 %542
      %v561 = vunpack.c.l.b16 %v433
      %v562 = vunpack.c.l.b16 %v434
      %v563 = vunpack.c.l.b16 %v435
      %v564 = vunpack.c.l.b16 %v436
      %v565 = vunpack.c.l.b16 %v437
      %v566 = vunpack.c.l.b16 %v438
      %v567 = vunpack.c.l.b16 %v439
      %v568 = vunpack.c.l.b16 %v440
      %v569 = vunpack.c.l.b16 %v441
      %v570 = vunpack.c.l.b16 %v442
      %v571 = vunpack.c.l.b16 %v443
      %v572 = vunpack.c.l.b16 %v444
      %v573 = vunpack.c.l.b16 %v445
      %v574 = vunpack.c.l.b16 %v446
      %v575 = vunpack.c.l.b16 %v447
      %v576 = vunpack.c.l.b16 %v448
      %v577 = vpack.c.b16 %v562, %v561
      %v578 = vpack.c.b16 %v564, %v563
      %v579 = vpack.c.b16 %v566, %v565
      %v580 = vpack.c.b16 %v568, %v567
      %v581 = vpack.c.b16 %v570, %v569
      %v582 = vpack.c.b16 %v572, %v571
      %v583 = vpack.c.b16 %v574, %v573
      %v584 = vpack.c.b16 %v576, %v575
      %vm585 = vcmask 359424
      %v587 = vsel %vm585, %v577, 0
      %v590 = vsel %vm585, %v578, 0
      %v593 = vsel %vm585, %v579, 0
      %v596 = vsel %vm585, %v580, 0
      %v599 = vsel %vm585, %v581, 0
      %v602 = vsel %vm585, %v582, 0
      %v605 = vsel %vm585, %v583, 0
      %v608 = vsel %vm585, %v584, 0
      %v611 = vsel %vm585, %v401, 0
      %v614 = vsel %vm585, %v402, 0
      %v617 = vsel %vm585, %v403, 0
      %v620 = vsel %vm585, %v404, 0
      %v623 = vsel %vm585, %v405, 0
      %v626 = vsel %vm585, %v406, 0
      %v629 = vsel %vm585, %v407, 0
      %v632 = vsel %vm585, %v408, 0
      %v635 = vsel %vm585, %v409, 0
      %v638 = vsel %vm585, %v410, 0
      %v641 = vsel %vm585, %v411, 0
      %v644 = vsel %vm585, %v412, 0
      %v647 = vsel %vm585, %v413, 0
      %v650 = vsel %vm585, %v414, 0
      %v653 = vsel %vm585, %v415, 0
      %v656 = vsel %vm585, %v416, 0
      %v659 = vsel %vm585, %v417, 0
      %v662 = vsel %vm585, %v418, 0
      %v665 = vsel %vm585, %v419, 0
      %v668 = vsel %vm585, %v420, 0
      %v671 = vsel %vm585, %v421, 0
      %v674 = vsel %vm585, %v422, 0
      %v677 = vsel %vm585, %v423, 0
      %v680 = vsel %vm585, %v424, 0
      %v683 = vsel %vm585, %v425, 0
      %v686 = vsel %vm585, %v426, 0
      %v689 = vsel %vm585, %v427, 0
      %v692 = vsel %vm585, %v428, 0
      %v695 = vsel %vm585, %v429, 0
      %v698 = vsel %vm585, %v430, 0
      %v701 = vsel %vm585, %v431, 0
      %v704 = vsel %vm585, %v432, 0
      %706 = vmatprep.subr.bf16.mxu0 0
      %707 = vmatpush1.bf16.xpose.msra.mxu0 %v611
      %708 = vmatprep.subr.bf16.mxu0 0
      %709 = vmatpush1.bf16.xpose.msra.mxu0 %v614
      %710 = vmatprep.subr.bf16.mxu0 0
      %711 = vmatpush1.bf16.xpose.msra.mxu0 %v617
      %712 = vmatprep.subr.bf16.mxu0 0
      %713 = vmatpush1.bf16.xpose.msra.mxu0 %v620
      %714 = vmatprep.subr.bf16.mxu0 0
      %715 = vmatpush1.bf16.xpose.msra.mxu0 %v623
      %716 = vmatprep.subr.bf16.mxu0 0
      %717 = vmatpush1.bf16.xpose.msra.mxu0 %v626
      %718 = vmatprep.subr.bf16.mxu0 0
      %719 = vmatpush1.bf16.xpose.msra.mxu0 %v629
      %720 = vmatprep.subr.bf16.mxu0 0
      %721 = vmatpush1.bf16.xpose.msra.mxu0 %v632
      %722 = vmatprep.subr.bf16.mxu0 0
      %723 = vmatpush1.bf16.xpose.msra.mxu0 %v635
      %724 = vmatprep.subr.bf16.mxu0 0
      %725 = vmatpush1.bf16.xpose.msra.mxu0 %v638
      %726 = vmatprep.subr.bf16.mxu0 0
      %727 = vmatpush1.bf16.xpose.msra.mxu0 %v641
      %728 = vmatprep.subr.bf16.mxu0 0
      %729 = vmatpush1.bf16.xpose.msra.mxu0 %v644
      %730 = vmatprep.subr.bf16.mxu0 0
      %731 = vmatpush1.bf16.xpose.msra.mxu0 %v647
      %732 = vmatprep.subr.bf16.mxu0 0
      %733 = vmatpush1.bf16.xpose.msra.mxu0 %v650
      %734 = vmatprep.subr.bf16.mxu0 0
      %735 = vmatpush1.bf16.xpose.msra.mxu0 %v653
      %736 = vmatprep.subr.bf16.mxu0 0
      %737 = vmatpush1.bf16.xpose.msra.mxu0 %v656
      %738 = vmatprep.mubr.bf16.mxu0 0
      %739 = vmatmul.mubr.bf16.gmra.mrb[0].mxu0 %v587
      %v740 = vpop.f32.mrb[0].mxu0
      %v741 = vadd.f32 %v468, %v740
      %v742 = vpop.f32.mrb[0].mxu0
      %v743 = vadd.f32 %v468, %v742
      %v744 = vpop.f32.mrb[0].mxu0
      %v745 = vadd.f32 %v473, %v744
      %v746 = vpop.f32.mrb[0].mxu0
      %v747 = vadd.f32 %v473, %v746
      %748 = vmatprep.mubr.bf16.mxu0 0
      %749 = vmatmul.mubr.bf16.gmra.mrb[0].mxu0 %v590
      %v750 = vpop.f32.mrb[0].mxu0
      %v751 = vadd.f32 %v478, %v750
      %v752 = vpop.f32.mrb[0].mxu0
      %v753 = vadd.f32 %v478, %v752
      %v754 = vpop.f32.mrb[0].mxu0
      %v755 = vadd.f32 %v483, %v754
      %v756 = vpop.f32.mrb[0].mxu0
      %v757 = vadd.f32 %v483, %v756
      %758 = vmatprep.mubr.bf16.mxu0 0
      %759 = vmatmul.mubr.bf16.gmra.mrb[0].mxu0 %v593
      %v760 = vpop.f32.mrb[0].mxu0
      %v761 = vadd.f32 %v488, %v760
      %v762 = vpop.f32.mrb[0].mxu0
      %v763 = vadd.f32 %v488, %v762
      %v764 = vpop.f32.mrb[0].mxu0
      %v765 = vadd.f32 %v493, %v764
      %v766 = vpop.f32.mrb[0].mxu0
      %v767 = vadd.f32 %v493, %v766
      %768 = vmatprep.mubr.bf16.mxu0 0
      %769 = vmatmul.mubr.bf16.gmra.mrb[0].mxu0 %v596
      %v770 = vpop.f32.mrb[0].mxu0
      %v771 = vadd.f32 %v498, %v770
      %v772 = vpop.f32.mrb[0].mxu0
      %v773 = vadd.f32 %v498, %v772
      %v774 = vpop.f32.mrb[0].mxu0
      %v775 = vadd.f32 %v503, %v774
      %v776 = vpop.f32.mrb[0].mxu0
      %v777 = vadd.f32 %v503, %v776
      %778 = vmatprep.mubr.bf16.mxu0 0
      %779 = vmatmul.mubr.bf16.gmra.mrb[0].mxu0 %v599
      %v780 = vpop.f32.mrb[0].mxu0
      %v781 = vadd.f32 %v508, %v780
      %v782 = vpop.f32.mrb[0].mxu0
      %v783 = vadd.f32 %v508, %v782
      %v784 = vpop.f32.mrb[0].mxu0
      %v785 = vadd.f32 %v513, %v784
      %v786 = vpop.f32.mrb[0].mxu0
      %v787 = vadd.f32 %v513, %v786
      %788 = vmatprep.mubr.bf16.mxu0 0
      %789 = vmatmul.mubr.bf16.gmra.mrb[0].mxu0 %v602
      %v790 = vpop.f32.mrb[0].mxu0
      %v791 = vadd.f32 %v518, %v790
      %v792 = vpop.f32.mrb[0].mxu0
      %v793 = vadd.f32 %v518, %v792
      %v794 = vpop.f32.mrb[0].mxu0
      %v795 = vadd.f32 %v523, %v794
      %v796 = vpop.f32.mrb[0].mxu0
      %v797 = vadd.f32 %v523, %v796
      %798 = vmatprep.mubr.bf16.mxu0 0
      %799 = vmatmul.mubr.bf16.gmra.mrb[0].mxu0 %v605
      %v800 = vpop.f32.mrb[0].mxu0
      %v801 = vadd.f32 %v528, %v800
      %v802 = vpop.f32.mrb[0].mxu0
      %v803 = vadd.f32 %v528, %v802
      %v804 = vpop.f32.mrb[0].mxu0
      %v805 = vadd.f32 %v533, %v804
      %v806 = vpop.f32.mrb[0].mxu0
      %v807 = vadd.f32 %v533, %v806
      %808 = vmatprep.mubr.bf16.mxu0 0
      %809 = vmatmul.mubr.bf16.gmra.mrb[0].mxu0 %v608
      %v810 = vpop.f32.mrb[0].mxu0
      %v811 = vadd.f32 %v538, %v810
      %v812 = vpop.f32.mrb[0].mxu0
      %v813 = vadd.f32 %v538, %v812
      %v814 = vpop.f32.mrb[0].mxu0
      %v815 = vadd.f32 %v543, %v814
      %v816 = vpop.f32.mrb[0].mxu0
      %v817 = vadd.f32 %v543, %v816
      %818 = vdwg.mxu0
      %819 = vmatprep.subr.bf16.mxu0 0
      %820 = vmatpush1.bf16.xpose.msra.mxu0 %v659
      %821 = vmatprep.subr.bf16.mxu0 0
      %822 = vmatpush1.bf16.xpose.msra.mxu0 %v662
      %823 = vmatprep.subr.bf16.mxu0 0
      %824 = vmatpush1.bf16.xpose.msra.mxu0 %v665
      %825 = vmatprep.subr.bf16.mxu0 0
      %826 = vmatpush1.bf16.xpose.msra.mxu0 %v668
      %827 = vmatprep.subr.bf16.mxu0 0
      %828 = vmatpush1.bf16.xpose.msra.mxu0 %v671
      %829 = vmatprep.subr.bf16.mxu0 0
      %830 = vmatpush1.bf16.xpose.msra.mxu0 %v674
      %831 = vmatprep.subr.bf16.mxu0 0
      %832 = vmatpush1.bf16.xpose.msra.mxu0 %v677
      %833 = vmatprep.subr.bf16.mxu0 0
      %834 = vmatpush1.bf16.xpose.msra.mxu0 %v680
      %835 = vmatprep.subr.bf16.mxu0 0
      %836 = vmatpush1.bf16.xpose.msra.mxu0 %v683
      %837 = vmatprep.subr.bf16.mxu0 0
      %838 = vmatpush1.bf16.xpose.msra.mxu0 %v686
      %839 = vmatprep.subr.bf16.mxu0 0
      %840 = vmatpush1.bf16.xpose.msra.mxu0 %v689
      %841 = vmatprep.subr.bf16.mxu0 0
      %842 = vmatpush1.bf16.xpose.msra.mxu0 %v692
      %843 = vmatprep.subr.bf16.mxu0 0
      %844 = vmatpush1.bf16.xpose.msra.mxu0 %v695
      %845 = vmatprep.subr.bf16.mxu0 0
      %846 = vmatpush1.bf16.xpose.msra.mxu0 %v698
      %847 = vmatprep.subr.bf16.mxu0 0
      %848 = vmatpush1.bf16.xpose.msra.mxu0 %v701
      %849 = vmatprep.subr.bf16.mxu0 0
      %850 = vmatpush1.bf16.xpose.msra.mxu0 %v704
      %851 = vmatprep.mubr.bf16.mxu0 0
      %852 = vmatmul.mubr.bf16.gmra.mrb[0].mxu0 %v587
      %v853 = vpop.f32.mrb[0].mxu0
      %v854 = vadd.f32 %v468, %v853
      %v855 = vpop.f32.mrb[0].mxu0
      %v856 = vadd.f32 %v468, %v855
      %v857 = vpop.f32.mrb[0].mxu0
      %v858 = vadd.f32 %v473, %v857
      %v859 = vpop.f32.mrb[0].mxu0
      %v860 = vadd.f32 %v473, %v859
      %861 = vmatprep.mubr.bf16.mxu0 0
      %862 = vmatmul.mubr.bf16.gmra.mrb[0].mxu0 %v590
      %v863 = vpop.f32.mrb[0].mxu0
      %v864 = vadd.f32 %v478, %v863
      %v865 = vpop.f32.mrb[0].mxu0
      %v866 = vadd.f32 %v478, %v865
      %v867 = vpop.f32.mrb[0].mxu0
      %v868 = vadd.f32 %v483, %v867
      %v869 = vpop.f32.mrb[0].mxu0
      %v870 = vadd.f32 %v483, %v869
      %871 = vmatprep.mubr.bf16.mxu0 0
      %872 = vmatmul.mubr.bf16.gmra.mrb[0].mxu0 %v593
      %v873 = vpop.f32.mrb[0].mxu0
      %v874 = vadd.f32 %v488, %v873
      %v875 = vpop.f32.mrb[0].mxu0
      %v876 = vadd.f32 %v488, %v875
      %v877 = vpop.f32.mrb[0].mxu0
      %v878 = vadd.f32 %v493, %v877
      %v879 = vpop.f32.mrb[0].mxu0
      %v880 = vadd.f32 %v493, %v879
      %881 = vmatprep.mubr.bf16.mxu0 0
      %882 = vmatmul.mubr.bf16.gmra.mrb[0].mxu0 %v596
      %v883 = vpop.f32.mrb[0].mxu0
      %v884 = vadd.f32 %v498, %v883
      %v885 = vpop.f32.mrb[0].mxu0
      %v886 = vadd.f32 %v498, %v885
      %v887 = vpop.f32.mrb[0].mxu0
      %v888 = vadd.f32 %v503, %v887
      %v889 = vpop.f32.mrb[0].mxu0
      %v890 = vadd.f32 %v503, %v889
      %891 = vmatprep.mubr.bf16.mxu0 0
      %892 = vmatmul.mubr.bf16.gmra.mrb[0].mxu0 %v599
      %v893 = vpop.f32.mrb[0].mxu0
      %v894 = vadd.f32 %v508, %v893
      %v895 = vpop.f32.mrb[0].mxu0
      %v896 = vadd.f32 %v508, %v895
      %v897 = vpop.f32.mrb[0].mxu0
      %v898 = vadd.f32 %v513, %v897
      %v899 = vpop.f32.mrb[0].mxu0
      %v900 = vadd.f32 %v513, %v899
      %901 = vmatprep.mubr.bf16.mxu0 0
      %902 = vmatmul.mubr.bf16.gmra.mrb[0].mxu0 %v602
      %v903 = vpop.f32.mrb[0].mxu0
      %v904 = vadd.f32 %v518, %v903
      %v905 = vpop.f32.mrb[0].mxu0
      %v906 = vadd.f32 %v518, %v905
      %v907 = vpop.f32.mrb[0].mxu0
      %v908 = vadd.f32 %v523, %v907
      %v909 = vpop.f32.mrb[0].mxu0
      %v910 = vadd.f32 %v523, %v909
      %911 = vmatprep.mubr.bf16.mxu0 0
      %912 = vmatmul.mubr.bf16.gmra.mrb[0].mxu0 %v605
      %v913 = vpop.f32.mrb[0].mxu0
      %v914 = vadd.f32 %v528, %v913
      %v915 = vpop.f32.mrb[0].mxu0
      %v916 = vadd.f32 %v528, %v915
      %v917 = vpop.f32.mrb[0].mxu0
      %v918 = vadd.f32 %v533, %v917
      %v919 = vpop.f32.mrb[0].mxu0
      %v920 = vadd.f32 %v533, %v919
      %921 = vmatprep.mubr.bf16.mxu0 0
      %922 = vmatmul.mubr.bf16.gmra.mrb[0].mxu0 %v608
      %v923 = vpop.f32.mrb[0].mxu0
      %v924 = vadd.f32 %v538, %v923
      %v925 = vpop.f32.mrb[0].mxu0
      %v926 = vadd.f32 %v538, %v925
      %v927 = vpop.f32.mrb[0].mxu0
      %v928 = vadd.f32 %v543, %v927
      %v929 = vpop.f32.mrb[0].mxu0
      %v930 = vadd.f32 %v543, %v929
      %931 = vdwg.mxu0
      %v932 = vmul.f32 %v741, 0.01
      %v933 = vmul.f32 %v743, 0.01
      %v934 = vmul.f32 %v854, 0.01
      %v935 = vmul.f32 %v856, 0.01
      %v936 = vmul.f32 %v745, 0.01
      %v937 = vmul.f32 %v747, 0.01
      %v938 = vmul.f32 %v858, 0.01
      %v939 = vmul.f32 %v860, 0.01
      %v940 = vmul.f32 %v751, 0.01
      %v941 = vmul.f32 %v753, 0.01
      %v942 = vmul.f32 %v864, 0.01
      %v943 = vmul.f32 %v866, 0.01
      %v944 = vmul.f32 %v755, 0.01
      %v945 = vmul.f32 %v757, 0.01
      %v946 = vmul.f32 %v868, 0.01
      %v947 = vmul.f32 %v870, 0.01
      %v948 = vmul.f32 %v761, 0.01
      %v949 = vmul.f32 %v763, 0.01
      %v950 = vmul.f32 %v874, 0.01
      %v951 = vmul.f32 %v876, 0.01
      %v952 = vmul.f32 %v765, 0.01
      %v953 = vmul.f32 %v767, 0.01
      %v954 = vmul.f32 %v878, 0.01
      %v955 = vmul.f32 %v880, 0.01
      %v956 = vmul.f32 %v771, 0.01
      %v957 = vmul.f32 %v773, 0.01
      %v958 = vmul.f32 %v884, 0.01
      %v959 = vmul.f32 %v886, 0.01
      %v960 = vmul.f32 %v775, 0.01
      %v961 = vmul.f32 %v777, 0.01
      %v962 = vmul.f32 %v888, 0.01
      %v963 = vmul.f32 %v890, 0.01
      %v964 = vmul.f32 %v781, 0.01
      %v965 = vmul.f32 %v783, 0.01
      %v966 = vmul.f32 %v894, 0.01
      %v967 = vmul.f32 %v896, 0.01
      %v968 = vmul.f32 %v785, 0.01
      %v969 = vmul.f32 %v787, 0.01
      %v970 = vmul.f32 %v898, 0.01
      %v971 = vmul.f32 %v900, 0.01
      %v972 = vmul.f32 %v791, 0.01
      %v973 = vmul.f32 %v793, 0.01
      %v974 = vmul.f32 %v904, 0.01
      %v975 = vmul.f32 %v906, 0.01
      %v976 = vmul.f32 %v795, 0.01
      %v977 = vmul.f32 %v797, 0.01
      %v978 = vmul.f32 %v908, 0.01
      %v979 = vmul.f32 %v910, 0.01
      %v980 = vmul.f32 %v801, 0.01
      %v981 = vmul.f32 %v803, 0.01
      %v982 = vmul.f32 %v914, 0.01
      %v983 = vmul.f32 %v916, 0.01
      %v984 = vmul.f32 %v805, 0.01
      %v985 = vmul.f32 %v807, 0.01
      %v986 = vmul.f32 %v918, 0.01
      %v987 = vmul.f32 %v920, 0.01
      %v988 = vmul.f32 %v811, 0.01
      %v989 = vmul.f32 %v813, 0.01
      %v990 = vmul.f32 %v924, 0.01
      %v991 = vmul.f32 %v926, 0.01
      %v992 = vmul.f32 %v815, 0.01
      %v993 = vmul.f32 %v817, 0.01
      %v994 = vmul.f32 %v928, 0.01
      %v995 = vmul.f32 %v930, 0.01
      %v996 = vmax.f32 %v741, %v932
      %v997 = vmax.f32 %v743, %v933
      %v998 = vmax.f32 %v854, %v934
      %v999 = vmax.f32 %v856, %v935
      %v1000 = vmax.f32 %v745, %v936
      %v1001 = vmax.f32 %v747, %v937
      %v1002 = vmax.f32 %v858, %v938
      %v1003 = vmax.f32 %v860, %v939
      %v1004 = vmax.f32 %v751, %v940
      %v1005 = vmax.f32 %v753, %v941
      %v1006 = vmax.f32 %v864, %v942
      %v1007 = vmax.f32 %v866, %v943
      %v1008 = vmax.f32 %v755, %v944
      %v1009 = vmax.f32 %v757, %v945
      %v1010 = vmax.f32 %v868, %v946
      %v1011 = vmax.f32 %v870, %v947
      %v1012 = vmax.f32 %v761, %v948
      %v1013 = vmax.f32 %v763, %v949
      %v1014 = vmax.f32 %v874, %v950
      %v1015 = vmax.f32 %v876, %v951
      %v1016 = vmax.f32 %v765, %v952
      %v1017 = vmax.f32 %v767, %v953
      %v1018 = vmax.f32 %v878, %v954
      %v1019 = vmax.f32 %v880, %v955
      %v1020 = vmax.f32 %v771, %v956
      %v1021 = vmax.f32 %v773, %v957
      %v1022 = vmax.f32 %v884, %v958
      %v1023 = vmax.f32 %v886, %v959
      %v1024 = vmax.f32 %v775, %v960
      %v1025 = vmax.f32 %v777, %v961
      %v1026 = vmax.f32 %v888, %v962
      %v1027 = vmax.f32 %v890, %v963
      %v1028 = vmax.f32 %v781, %v964
      %v1029 = vmax.f32 %v783, %v965
      %v1030 = vmax.f32 %v894, %v966
      %v1031 = vmax.f32 %v896, %v967
      %v1032 = vmax.f32 %v785, %v968
      %v1033 = vmax.f32 %v787, %v969
      %v1034 = vmax.f32 %v898, %v970
      %v1035 = vmax.f32 %v900, %v971
      %v1036 = vmax.f32 %v791, %v972
      %v1037 = vmax.f32 %v793, %v973
      %v1038 = vmax.f32 %v904, %v974
      %v1039 = vmax.f32 %v906, %v975
      %v1040 = vmax.f32 %v795, %v976
      %v1041 = vmax.f32 %v797, %v977
      %v1042 = vmax.f32 %v908, %v978
      %v1043 = vmax.f32 %v910, %v979
      %v1044 = vmax.f32 %v801, %v980
      %v1045 = vmax.f32 %v803, %v981
      %v1046 = vmax.f32 %v914, %v982
      %v1047 = vmax.f32 %v916, %v983
      %v1048 = vmax.f32 %v805, %v984
      %v1049 = vmax.f32 %v807, %v985
      %v1050 = vmax.f32 %v918, %v986
      %v1051 = vmax.f32 %v920, %v987
      %v1052 = vmax.f32 %v811, %v988
      %v1053 = vmax.f32 %v813, %v989
      %v1054 = vmax.f32 %v924, %v990
      %v1055 = vmax.f32 %v926, %v991
      %v1056 = vmax.f32 %v815, %v992
      %v1057 = vmax.f32 %v817, %v993
      %v1058 = vmax.f32 %v928, %v994
      %v1059 = vmax.f32 %v930, %v995
      %v1060 = vld [vmem:[%s3] sm:$0xf]
      %v1061 = vld [vmem:[%s3 + $0x4] sm:$0xf]
      %v1062 = vld [vmem:[%s3 + $0x8] sm:$0xf]
      %v1063 = vld [vmem:[%s3 + $0xc] sm:$0xf]
      %v1064 = vld [vmem:[%s3 + $0x10] sm:$0xf]
      %v1065 = vld [vmem:[%s3 + $0x14] sm:$0xf]
      %v1066 = vld [vmem:[%s3 + $0x18] sm:$0xf]
      %v1067 = vld [vmem:[%s3 + $0x1c] sm:$0xf]
      %v1068 = vpack.c.bf16 %v1000, %v996
      %v1069 = vpack.c.bf16 %v1001, %v997
      %v1070 = vpack.c.bf16 %v1002, %v998
      %v1071 = vpack.c.bf16 %v1003, %v999
      %v1072 = vpack.c.bf16 %v1008, %v1004
      %v1073 = vpack.c.bf16 %v1009, %v1005
      %v1074 = vpack.c.bf16 %v1010, %v1006
      %v1075 = vpack.c.bf16 %v1011, %v1007
      %v1076 = vpack.c.bf16 %v1016, %v1012
      %v1077 = vpack.c.bf16 %v1017, %v1013
      %v1078 = vpack.c.bf16 %v1018, %v1014
      %v1079 = vpack.c.bf16 %v1019, %v1015
      %v1080 = vpack.c.bf16 %v1024, %v1020
      %v1081 = vpack.c.bf16 %v1025, %v1021
      %v1082 = vpack.c.bf16 %v1026, %v1022
      %v1083 = vpack.c.bf16 %v1027, %v1023
      %v1084 = vpack.c.bf16 %v1032, %v1028
      %v1085 = vpack.c.bf16 %v1033, %v1029
      %v1086 = vpack.c.bf16 %v1034, %v1030
      %v1087 = vpack.c.bf16 %v1035, %v1031
      %v1088 = vpack.c.bf16 %v1040, %v1036
      %v1089 = vpack.c.bf16 %v1041, %v1037
      %v1090 = vpack.c.bf16 %v1042, %v1038
      %v1091 = vpack.c.bf16 %v1043, %v1039
      %v1092 = vpack.c.bf16 %v1048, %v1044
      %v1093 = vpack.c.bf16 %v1049, %v1045
      %v1094 = vpack.c.bf16 %v1050, %v1046
      %v1095 = vpack.c.bf16 %v1051, %v1047
      %v1096 = vpack.c.bf16 %v1056, %v1052
      %v1097 = vpack.c.bf16 %v1057, %v1053
      %v1098 = vpack.c.bf16 %v1058, %v1054
      %v1099 = vpack.c.bf16 %v1059, %v1055
      %v1100 = vld [vmem:[%s4] sm:$0xff]
      %v1101 = vld [vmem:[%s4 + $0x8] sm:$0xff]
      %v1102 = vld [vmem:[%s4 + $0x10] sm:$0xff]
      %v1103 = vld [vmem:[%s4 + $0x18] sm:$0xff]
      %v1104 = vld [vmem:[%s4 + $0x20] sm:$0xff]
      %v1105 = vld [vmem:[%s4 + $0x28] sm:$0xff]
      %v1106 = vld [vmem:[%s4 + $0x30] sm:$0xff]
      %v1107 = vld [vmem:[%s4 + $0x38] sm:$0xff]
      %1109 = vset.pattern.permute.xlu0 0
      %1110 = vperm.xlu0 %1109, %v1100
      %v1111 = vpop.permute.xlu0 %1110
      %1114 = vset.pattern.permute.xlu0 0
      %1115 = vperm.xlu0 %1114, %v1101
      %v1116 = vpop.permute.xlu0 %1115
      %1119 = vset.pattern.permute.xlu0 0
      %1120 = vperm.xlu0 %1119, %v1102
      %v1121 = vpop.permute.xlu0 %1120
      %1124 = vset.pattern.permute.xlu0 0
      %1125 = vperm.xlu0 %1124, %v1103
      %v1126 = vpop.permute.xlu0 %1125
      %1129 = vset.pattern.permute.xlu0 0
      %1130 = vperm.xlu0 %1129, %v1104
      %v1131 = vpop.permute.xlu0 %1130
      %1134 = vset.pattern.permute.xlu0 0
      %1135 = vperm.xlu0 %1134, %v1105
      %v1136 = vpop.permute.xlu0 %1135
      %1139 = vset.pattern.permute.xlu0 0
      %1140 = vperm.xlu0 %1139, %v1106
      %v1141 = vpop.permute.xlu0 %1140
      %1144 = vset.pattern.permute.xlu0 0
      %1145 = vperm.xlu0 %1144, %v1107
      %v1146 = vpop.permute.xlu0 %1145
      %v1156 = vunpack.c.l.b16 %v1060
      %v1157 = vunpack.c.l.b16 %v1061
      %v1158 = vunpack.c.l.b16 %v1062
      %v1159 = vunpack.c.l.b16 %v1063
      %v1160 = vunpack.c.l.b16 %v1064
      %v1161 = vunpack.c.l.b16 %v1065
      %v1162 = vunpack.c.l.b16 %v1066
      %v1163 = vunpack.c.l.b16 %v1067
      %v1164 = vpack.c.b16 %v1157, %v1156
      %v1165 = vpack.c.b16 %v1159, %v1158
      %v1166 = vpack.c.b16 %v1161, %v1160
      %v1167 = vpack.c.b16 %v1163, %v1162
      %1172 = vmatprep.subr.bf16.mxu0 %v1069
      %1173 = vmatpush1.bf16.msra.mxu0 %v1068
      %1174 = vmatprep.subr.bf16.mxu0 %v1073
      %1175 = vmatpush1.bf16.msra.mxu0 %v1072
      %1176 = vmatprep.subr.bf16.mxu0 %v1077
      %1177 = vmatpush1.bf16.msra.mxu0 %v1076
      %1178 = vmatprep.subr.bf16.mxu0 %v1081
      %1179 = vmatpush1.bf16.msra.mxu0 %v1080
      %1180 = vmatprep.subr.bf16.mxu0 %v1085
      %1181 = vmatpush1.bf16.msra.mxu0 %v1084
      %1182 = vmatprep.subr.bf16.mxu0 %v1089
      %1183 = vmatpush1.bf16.msra.mxu0 %v1088
      %1184 = vmatprep.subr.bf16.mxu0 %v1093
      %1185 = vmatpush1.bf16.msra.mxu0 %v1092
      %1186 = vmatprep.subr.bf16.mxu0 %v1097
      %1187 = vmatpush1.bf16.msra.mxu0 %v1096
      %1188 = vmatprep.subr.bf16.mxu0 0
      %1189 = vmatpush1.bf16.msra.mxu0 0
      %1190 = vmatprep.subr.bf16.mxu0 0
      %1191 = vmatpush1.bf16.msra.mxu0 0
      %1192 = vmatprep.subr.bf16.mxu0 0
      %1193 = vmatpush1.bf16.msra.mxu0 0
      %1194 = vmatprep.subr.bf16.mxu0 0
      %1195 = vmatpush1.bf16.msra.mxu0 0
      %1196 = vmatprep.subr.bf16.mxu0 0
      %1197 = vmatpush1.bf16.msra.mxu0 0
      %1198 = vmatprep.subr.bf16.mxu0 0
      %1199 = vmatpush1.bf16.msra.mxu0 0
      %1200 = vmatprep.subr.bf16.mxu0 0
      %1201 = vmatpush1.bf16.msra.mxu0 0
      %1202 = vmatprep.subr.bf16.mxu0 0
      %1203 = vmatpush1.bf16.msra.mxu0 0
      %1204 = vmatprep.mubr.bf16.mxu0 0
      %1205 = vmatmul.mubr.bf16.gmra.mrb[0].mxu0 %v1164
      %v1206 = vpop.f32.mrb[0].mxu0
      %v1207 = vadd.f32 %v1111, %v1206
      %v1208 = vpop.f32.mrb[0].mxu0
      %v1209 = vadd.f32 %v1111, %v1208
      %v1210 = vpop.f32.mrb[0].mxu0
      %v1211 = vadd.f32 %v1116, %v1210
      %v1212 = vpop.f32.mrb[0].mxu0
      %v1213 = vadd.f32 %v1116, %v1212
      %1214 = vmatprep.mubr.bf16.mxu0 0
      %1215 = vmatmul.mubr.bf16.gmra.mrb[0].mxu0 %v1165
      %v1216 = vpop.f32.mrb[0].mxu0
      %v1217 = vadd.f32 %v1121, %v1216
      %v1218 = vpop.f32.mrb[0].mxu0
      %v1219 = vadd.f32 %v1121, %v1218
      %v1220 = vpop.f32.mrb[0].mxu0
      %v1221 = vadd.f32 %v1126, %v1220
      %v1222 = vpop.f32.mrb[0].mxu0
      %v1223 = vadd.f32 %v1126, %v1222
      %1224 = vmatprep.mubr.bf16.mxu0 0
      %1225 = vmatmul.mubr.bf16.gmra.mrb[0].mxu0 %v1166
      %v1226 = vpop.f32.mrb[0].mxu0
      %v1227 = vadd.f32 %v1131, %v1226
      %v1228 = vpop.f32.mrb[0].mxu0
      %v1229 = vadd.f32 %v1131, %v1228
      %v1230 = vpop.f32.mrb[0].mxu0
      %v1231 = vadd.f32 %v1136, %v1230
      %v1232 = vpop.f32.mrb[0].mxu0
      %v1233 = vadd.f32 %v1136, %v1232
      %1234 = vmatprep.mubr.bf16.mxu0 0
      %1235 = vmatmul.mubr.bf16.gmra.mrb[0].mxu0 %v1167
      %v1236 = vpop.f32.mrb[0].mxu0
      %v1237 = vadd.f32 %v1141, %v1236
      %v1238 = vpop.f32.mrb[0].mxu0
      %v1239 = vadd.f32 %v1141, %v1238
      %v1240 = vpop.f32.mrb[0].mxu0
      %v1241 = vadd.f32 %v1146, %v1240
      %v1242 = vpop.f32.mrb[0].mxu0
      %v1243 = vadd.f32 %v1146, %v1242
      %1244 = vdwg.mxu0
      %1245 = vmatprep.subr.bf16.mxu0 %v1071
      %1246 = vmatpush1.bf16.msra.mxu0 %v1070
      %1247 = vmatprep.subr.bf16.mxu0 %v1075
      %1248 = vmatpush1.bf16.msra.mxu0 %v1074
      %1249 = vmatprep.subr.bf16.mxu0 %v1079
      %1250 = vmatpush1.bf16.msra.mxu0 %v1078
      %1251 = vmatprep.subr.bf16.mxu0 %v1083
      %1252 = vmatpush1.bf16.msra.mxu0 %v1082
      %1253 = vmatprep.subr.bf16.mxu0 %v1087
      %1254 = vmatpush1.bf16.msra.mxu0 %v1086
      %1255 = vmatprep.subr.bf16.mxu0 %v1091
      %1256 = vmatpush1.bf16.msra.mxu0 %v1090
      %1257 = vmatprep.subr.bf16.mxu0 %v1095
      %1258 = vmatpush1.bf16.msra.mxu0 %v1094
      %1259 = vmatprep.subr.bf16.mxu0 %v1099
      %1260 = vmatpush1.bf16.msra.mxu0 %v1098
      %1261 = vmatprep.subr.bf16.mxu0 0
      %1262 = vmatpush1.bf16.msra.mxu0 0
      %1263 = vmatprep.subr.bf16.mxu0 0
      %1264 = vmatpush1.bf16.msra.mxu0 0
      %1265 = vmatprep.subr.bf16.mxu0 0
      %1266 = vmatpush1.bf16.msra.mxu0 0
      %1267 = vmatprep.subr.bf16.mxu0 0
      %1268 = vmatpush1.bf16.msra.mxu0 0
      %1269 = vmatprep.subr.bf16.mxu0 0
      %1270 = vmatpush1.bf16.msra.mxu0 0
      %1271 = vmatprep.subr.bf16.mxu0 0
      %1272 = vmatpush1.bf16.msra.mxu0 0
      %1273 = vmatprep.subr.bf16.mxu0 0
      %1274 = vmatpush1.bf16.msra.mxu0 0
      %1275 = vmatprep.subr.bf16.mxu0 0
      %1276 = vmatpush1.bf16.msra.mxu0 0
      %1277 = vmatprep.mubr.bf16.mxu0 0
      %1278 = vmatmul.mubr.bf16.gmra.mrb[0].mxu0 %v1164
      %v1279 = vpop.f32.mrb[0].mxu0
      %v1280 = vadd.f32 %v1111, %v1279
      %v1281 = vpop.f32.mrb[0].mxu0
      %v1282 = vadd.f32 %v1111, %v1281
      %v1283 = vpop.f32.mrb[0].mxu0
      %v1284 = vadd.f32 %v1116, %v1283
      %v1285 = vpop.f32.mrb[0].mxu0
      %v1286 = vadd.f32 %v1116, %v1285
      %1287 = vmatprep.mubr.bf16.mxu0 0
      %1288 = vmatmul.mubr.bf16.gmra.mrb[0].mxu0 %v1165
      %v1289 = vpop.f32.mrb[0].mxu0
      %v1290 = vadd.f32 %v1121, %v1289
      %v1291 = vpop.f32.mrb[0].mxu0
      %v1292 = vadd.f32 %v1121, %v1291
      %v1293 = vpop.f32.mrb[0].mxu0
      %v1294 = vadd.f32 %v1126, %v1293
      %v1295 = vpop.f32.mrb[0].mxu0
      %v1296 = vadd.f32 %v1126, %v1295
      %1297 = vmatprep.mubr.bf16.mxu0 0
      %1298 = vmatmul.mubr.bf16.gmra.mrb[0].mxu0 %v1166
      %v1299 = vpop.f32.mrb[0].mxu0
      %v1300 = vadd.f32 %v1131, %v1299
      %v1301 = vpop.f32.mrb[0].mxu0
      %v1302 = vadd.f32 %v1131, %v1301
      %v1303 = vpop.f32.mrb[0].mxu0
      %v1304 = vadd.f32 %v1136, %v1303
      %v1305 = vpop.f32.mrb[0].mxu0
      %v1306 = vadd.f32 %v1136, %v1305
      %1307 = vmatprep.mubr.bf16.mxu0 0
      %1308 = vmatmul.mubr.bf16.gmra.mrb[0].mxu0 %v1167
      %v1309 = vpop.f32.mrb[0].mxu0
      %v1310 = vadd.f32 %v1141, %v1309
      %v1311 = vpop.f32.mrb[0].mxu0
      %v1312 = vadd.f32 %v1141, %v1311
      %v1313 = vpop.f32.mrb[0].mxu0
      %v1314 = vadd.f32 %v1146, %v1313
      %v1315 = vpop.f32.mrb[0].mxu0
      %v1316 = vadd.f32 %v1146, %v1315
      %1317 = vdwg.mxu0
      %v1318 = vmul.f32 %v1207, 0.01
      %v1319 = vmul.f32 %v1209, 0.01
      %v1320 = vmul.f32 %v1280, 0.01
      %v1321 = vmul.f32 %v1282, 0.01
      %v1322 = vmul.f32 %v1211, 0.01
      %v1323 = vmul.f32 %v1213, 0.01
      %v1324 = vmul.f32 %v1284, 0.01
      %v1325 = vmul.f32 %v1286, 0.01
      %v1326 = vmul.f32 %v1217, 0.01
      %v1327 = vmul.f32 %v1219, 0.01
      %v1328 = vmul.f32 %v1290, 0.01
      %v1329 = vmul.f32 %v1292, 0.01
      %v1330 = vmul.f32 %v1221, 0.01
      %v1331 = vmul.f32 %v1223, 0.01
      %v1332 = vmul.f32 %v1294, 0.01
      %v1333 = vmul.f32 %v1296, 0.01
      %v1334 = vmul.f32 %v1227, 0.01
      %v1335 = vmul.f32 %v1229, 0.01
      %v1336 = vmul.f32 %v1300, 0.01
      %v1337 = vmul.f32 %v1302, 0.01
      %v1338 = vmul.f32 %v1231, 0.01
      %v1339 = vmul.f32 %v1233, 0.01
      %v1340 = vmul.f32 %v1304, 0.01
      %v1341 = vmul.f32 %v1306, 0.01
      %v1342 = vmul.f32 %v1237, 0.01
      %v1343 = vmul.f32 %v1239, 0.01
      %v1344 = vmul.f32 %v1310, 0.01
      %v1345 = vmul.f32 %v1312, 0.01
      %v1346 = vmul.f32 %v1241, 0.01
      %v1347 = vmul.f32 %v1243, 0.01
      %v1348 = vmul.f32 %v1314, 0.01
      %v1349 = vmul.f32 %v1316, 0.01
      %v1350 = vmax.f32 %v1207, %v1318
      %v1351 = vmax.f32 %v1209, %v1319
      %v1352 = vmax.f32 %v1280, %v1320
      %v1353 = vmax.f32 %v1282, %v1321
      %v1354 = vmax.f32 %v1211, %v1322
      %v1355 = vmax.f32 %v1213, %v1323
      %v1356 = vmax.f32 %v1284, %v1324
      %v1357 = vmax.f32 %v1286, %v1325
      %v1358 = vmax.f32 %v1217, %v1326
      %v1359 = vmax.f32 %v1219, %v1327
      %v1360 = vmax.f32 %v1290, %v1328
      %v1361 = vmax.f32 %v1292, %v1329
      %v1362 = vmax.f32 %v1221, %v1330
      %v1363 = vmax.f32 %v1223, %v1331
      %v1364 = vmax.f32 %v1294, %v1332
      %v1365 = vmax.f32 %v1296, %v1333
      %v1366 = vmax.f32 %v1227, %v1334
      %v1367 = vmax.f32 %v1229, %v1335
      %v1368 = vmax.f32 %v1300, %v1336
      %v1369 = vmax.f32 %v1302, %v1337
      %v1370 = vmax.f32 %v1231, %v1338
      %v1371 = vmax.f32 %v1233, %v1339
      %v1372 = vmax.f32 %v1304, %v1340
      %v1373 = vmax.f32 %v1306, %v1341
      %v1374 = vmax.f32 %v1237, %v1342
      %v1375 = vmax.f32 %v1239, %v1343
      %v1376 = vmax.f32 %v1310, %v1344
      %v1377 = vmax.f32 %v1312, %v1345
      %v1378 = vmax.f32 %v1241, %v1346
      %v1379 = vmax.f32 %v1243, %v1347
      %v1380 = vmax.f32 %v1314, %v1348
      %v1381 = vmax.f32 %v1316, %v1349
      %v1382 = vld [vmem:[%s5] sm:$0xf]
      %v1383 = vld [vmem:[%s5 + $0x4] sm:$0xf]
      %v1384 = vld [vmem:[%s5 + $0x8] sm:$0xf]
      %v1385 = vld [vmem:[%s5 + $0xc] sm:$0xf]
      %v1386 = vpack.c.bf16 %v1354, %v1350
      %v1387 = vpack.c.bf16 %v1355, %v1351
      %v1388 = vpack.c.bf16 %v1356, %v1352
      %v1389 = vpack.c.bf16 %v1357, %v1353
      %v1390 = vpack.c.bf16 %v1362, %v1358
      %v1391 = vpack.c.bf16 %v1363, %v1359
      %v1392 = vpack.c.bf16 %v1364, %v1360
      %v1393 = vpack.c.bf16 %v1365, %v1361
      %v1394 = vpack.c.bf16 %v1370, %v1366
      %v1395 = vpack.c.bf16 %v1371, %v1367
      %v1396 = vpack.c.bf16 %v1372, %v1368
      %v1397 = vpack.c.bf16 %v1373, %v1369
      %v1398 = vpack.c.bf16 %v1378, %v1374
      %v1399 = vpack.c.bf16 %v1379, %v1375
      %v1400 = vpack.c.bf16 %v1380, %v1376
      %v1401 = vpack.c.bf16 %v1381, %v1377
      %v1402 = vld [vmem:[%s6] sm:$0xff]
      %v1403 = vld [vmem:[%s6 + $0x8] sm:$0xff]
      %v1404 = vld [vmem:[%s6 + $0x10] sm:$0xff]
      %v1405 = vld [vmem:[%s6 + $0x18] sm:$0xff]
      %1407 = vset.pattern.permute.xlu0 0
      %1408 = vperm.xlu0 %1407, %v1402
      %v1409 = vpop.permute.xlu0 %1408
      %1412 = vset.pattern.permute.xlu0 0
      %1413 = vperm.xlu0 %1412, %v1403
      %v1414 = vpop.permute.xlu0 %1413
      %1417 = vset.pattern.permute.xlu0 0
      %1418 = vperm.xlu0 %1417, %v1404
      %v1419 = vpop.permute.xlu0 %1418
      %1422 = vset.pattern.permute.xlu0 0
      %1423 = vperm.xlu0 %1422, %v1405
      %v1424 = vpop.permute.xlu0 %1423
      %v1430 = vunpack.c.l.b16 %v1382
      %v1431 = vunpack.c.l.b16 %v1383
      %v1432 = vunpack.c.l.b16 %v1384
      %v1433 = vunpack.c.l.b16 %v1385
      %v1434 = vpack.c.b16 %v1431, %v1430
      %v1435 = vpack.c.b16 %v1433, %v1432
      %vm1436 = vcmask 523264
      %v1438 = vsel %vm1436, %v1434, 0
      %v1441 = vsel %vm1436, %v1435, 0
      %1443 = vmatprep.subr.bf16.mxu0 %v1387
      %1444 = vmatpush1.bf16.msra.mxu0 %v1386
      %1445 = vmatprep.subr.bf16.mxu0 %v1391
      %1446 = vmatpush1.bf16.msra.mxu0 %v1390
      %1447 = vmatprep.subr.bf16.mxu0 %v1395
      %1448 = vmatpush1.bf16.msra.mxu0 %v1394
      %1449 = vmatprep.subr.bf16.mxu0 %v1399
      %1450 = vmatpush1.bf16.msra.mxu0 %v1398
      %1451 = vmatprep.subr.bf16.mxu0 0
      %1452 = vmatpush1.bf16.msra.mxu0 0
      %1453 = vmatprep.subr.bf16.mxu0 0
      %1454 = vmatpush1.bf16.msra.mxu0 0
      %1455 = vmatprep.subr.bf16.mxu0 0
      %1456 = vmatpush1.bf16.msra.mxu0 0
      %1457 = vmatprep.subr.bf16.mxu0 0
      %1458 = vmatpush1.bf16.msra.mxu0 0
      %1459 = vmatprep.subr.bf16.mxu0 0
      %1460 = vmatpush1.bf16.msra.mxu0 0
      %1461 = vmatprep.subr.bf16.mxu0 0
      %1462 = vmatpush1.bf16.msra.mxu0 0
      %1463 = vmatprep.subr.bf16.mxu0 0
      %1464 = vmatpush1.bf16.msra.mxu0 0
      %1465 = vmatprep.subr.bf16.mxu0 0
      %1466 = vmatpush1.bf16.msra.mxu0 0
      %1467 = vmatprep.subr.bf16.mxu0 0
      %1468 = vmatpush1.bf16.msra.mxu0 0
      %1469 = vmatprep.subr.bf16.mxu0 0
      %1470 = vmatpush1.bf16.msra.mxu0 0
      %1471 = vmatprep.subr.bf16.mxu0 0
      %1472 = vmatpush1.bf16.msra.mxu0 0
      %1473 = vmatprep.subr.bf16.mxu0 0
      %1474 = vmatpush1.bf16.msra.mxu0 0
      %1475 = vmatprep.mubr.bf16.mxu0 0
      %1476 = vmatmul.mubr.bf16.gmra.mrb[0].mxu0 %v1438
      %v1477 = vpop.f32.mrb[0].mxu0
      %v1478 = vadd.f32 %v1409, %v1477
      %v1479 = vpop.f32.mrb[0].mxu0
      %v1480 = vadd.f32 %v1409, %v1479
      %v1481 = vpop.f32.mrb[0].mxu0
      %v1482 = vadd.f32 %v1414, %v1481
      %v1483 = vpop.f32.mrb[0].mxu0
      %v1484 = vadd.f32 %v1414, %v1483
      %1485 = vmatprep.mubr.bf16.mxu0 0
      %1486 = vmatmul.mubr.bf16.gmra.mrb[0].mxu0 %v1441
      %v1487 = vpop.f32.mrb[0].mxu0
      %v1488 = vadd.f32 %v1419, %v1487
      %v1489 = vpop.f32.mrb[0].mxu0
      %v1490 = vadd.f32 %v1419, %v1489
      %v1491 = vpop.f32.mrb[0].mxu0
      %v1492 = vadd.f32 %v1424, %v1491
      %v1493 = vpop.f32.mrb[0].mxu0
      %v1494 = vadd.f32 %v1424, %v1493
      %1495 = vdwg.mxu0
      %1496 = vmatprep.subr.bf16.mxu0 %v1389
      %1497 = vmatpush1.bf16.msra.mxu0 %v1388
      %1498 = vmatprep.subr.bf16.mxu0 %v1393
      %1499 = vmatpush1.bf16.msra.mxu0 %v1392
      %1500 = vmatprep.subr.bf16.mxu0 %v1397
      %1501 = vmatpush1.bf16.msra.mxu0 %v1396
      %1502 = vmatprep.subr.bf16.mxu0 %v1401
      %1503 = vmatpush1.bf16.msra.mxu0 %v1400
      %1504 = vmatprep.subr.bf16.mxu0 0
      %1505 = vmatpush1.bf16.msra.mxu0 0
      %1506 = vmatprep.subr.bf16.mxu0 0
      %1507 = vmatpush1.bf16.msra.mxu0 0
      %1508 = vmatprep.subr.bf16.mxu0 0
      %1509 = vmatpush1.bf16.msra.mxu0 0
      %1510 = vmatprep.subr.bf16.mxu0 0
      %1511 = vmatpush1.bf16.msra.mxu0 0
      %1512 = vmatprep.subr.bf16.mxu0 0
      %1513 = vmatpush1.bf16.msra.mxu0 0
      %1514 = vmatprep.subr.bf16.mxu0 0
      %1515 = vmatpush1.bf16.msra.mxu0 0
      %1516 = vmatprep.subr.bf16.mxu0 0
      %1517 = vmatpush1.bf16.msra.mxu0 0
      %1518 = vmatprep.subr.bf16.mxu0 0
      %1519 = vmatpush1.bf16.msra.mxu0 0
      %1520 = vmatprep.subr.bf16.mxu0 0
      %1521 = vmatpush1.bf16.msra.mxu0 0
      %1522 = vmatprep.subr.bf16.mxu0 0
      %1523 = vmatpush1.bf16.msra.mxu0 0
      %1524 = vmatprep.subr.bf16.mxu0 0
      %1525 = vmatpush1.bf16.msra.mxu0 0
      %1526 = vmatprep.subr.bf16.mxu0 0
      %1527 = vmatpush1.bf16.msra.mxu0 0
      %1528 = vmatprep.mubr.bf16.mxu0 0
      %1529 = vmatmul.mubr.bf16.gmra.mrb[0].mxu0 %v1438
      %v1530 = vpop.f32.mrb[0].mxu0
      %v1531 = vadd.f32 %v1409, %v1530
      %v1532 = vpop.f32.mrb[0].mxu0
      %v1533 = vadd.f32 %v1409, %v1532
      %v1534 = vpop.f32.mrb[0].mxu0
      %v1535 = vadd.f32 %v1414, %v1534
      %v1536 = vpop.f32.mrb[0].mxu0
      %v1537 = vadd.f32 %v1414, %v1536
      %1538 = vmatprep.mubr.bf16.mxu0 0
      %1539 = vmatmul.mubr.bf16.gmra.mrb[0].mxu0 %v1441
      %v1540 = vpop.f32.mrb[0].mxu0
      %v1541 = vadd.f32 %v1419, %v1540
      %v1542 = vpop.f32.mrb[0].mxu0
      %v1543 = vadd.f32 %v1419, %v1542
      %v1544 = vpop.f32.mrb[0].mxu0
      %v1545 = vadd.f32 %v1424, %v1544
      %v1546 = vpop.f32.mrb[0].mxu0
      %v1547 = vadd.f32 %v1424, %v1546
      %1548 = vdwg.mxu0
      %v1549 = vmul.f32 %v1478, 0.01
      %v1550 = vmul.f32 %v1480, 0.01
      %v1551 = vmul.f32 %v1531, 0.01
      %v1552 = vmul.f32 %v1533, 0.01
      %v1553 = vmul.f32 %v1482, 0.01
      %v1554 = vmul.f32 %v1484, 0.01
      %v1555 = vmul.f32 %v1535, 0.01
      %v1556 = vmul.f32 %v1537, 0.01
      %v1557 = vmul.f32 %v1488, 0.01
      %v1558 = vmul.f32 %v1490, 0.01
      %v1559 = vmul.f32 %v1541, 0.01
      %v1560 = vmul.f32 %v1543, 0.01
      %v1561 = vmul.f32 %v1492, 0.01
      %v1562 = vmul.f32 %v1494, 0.01
      %v1563 = vmul.f32 %v1545, 0.01
      %v1564 = vmul.f32 %v1547, 0.01
      %v1565 = vmax.f32 %v1478, %v1549
      %v1566 = vmax.f32 %v1480, %v1550
      %v1567 = vmax.f32 %v1531, %v1551
      %v1568 = vmax.f32 %v1533, %v1552
      %v1569 = vmax.f32 %v1482, %v1553
      %v1570 = vmax.f32 %v1484, %v1554
      %v1571 = vmax.f32 %v1535, %v1555
      %v1572 = vmax.f32 %v1537, %v1556
      %v1573 = vmax.f32 %v1488, %v1557
      %v1574 = vmax.f32 %v1490, %v1558
      %v1575 = vmax.f32 %v1541, %v1559
      %v1576 = vmax.f32 %v1543, %v1560
      %v1577 = vmax.f32 %v1492, %v1561
      %v1578 = vmax.f32 %v1494, %v1562
      %v1579 = vmax.f32 %v1545, %v1563
      %v1580 = vmax.f32 %v1547, %v1564
      %v1581 = vld [vmem:[%s7] sm:$0xff]
      %v1582 = vld [vmem:[%s7 + $0x8] sm:$0xff]
      %v1583 = vld [vmem:[%s7 + $0x10] sm:$0xff]
      %v1584 = vld [vmem:[%s7 + $0x18] sm:$0xff]
      %1586 = vset.pattern.permute.xlu0 0
      %1587 = vperm.xlu0 %1586, %v1581
      %v1588 = vpop.permute.xlu0 %1587
      %1591 = vset.pattern.permute.xlu0 0
      %1592 = vperm.xlu0 %1591, %v1582
      %v1593 = vpop.permute.xlu0 %1592
      %1596 = vset.pattern.permute.xlu0 0
      %1597 = vperm.xlu0 %1596, %v1583
      %v1598 = vpop.permute.xlu0 %1597
      %1601 = vset.pattern.permute.xlu0 0
      %1602 = vperm.xlu0 %1601, %v1584
      %v1603 = vpop.permute.xlu0 %1602
      %v1605 = vmul.f32 %v1565, %v1588
      %v1606 = vmul.f32 %v1566, %v1588
      %v1607 = vmul.f32 %v1567, %v1588
      %v1608 = vmul.f32 %v1568, %v1588
      %v1609 = vmul.f32 %v1569, %v1593
      %v1610 = vmul.f32 %v1570, %v1593
      %v1611 = vmul.f32 %v1571, %v1593
      %v1612 = vmul.f32 %v1572, %v1593
      %v1613 = vmul.f32 %v1573, %v1598
      %v1614 = vmul.f32 %v1574, %v1598
      %v1615 = vmul.f32 %v1575, %v1598
      %v1616 = vmul.f32 %v1576, %v1598
      %v1617 = vmul.f32 %v1577, %v1603
      %v1618 = vmul.f32 %v1578, %v1603
      %v1619 = vmul.f32 %v1579, %v1603
      %v1620 = vmul.f32 %v1580, %v1603
      %v1621 = vadd.f32 %v1605, %v1609
      %v1622 = vadd.f32 %v1621, %v1613
      %v1623 = vadd.f32 %v1622, %v1617
      %v1624 = vrot.slane %v1623, 4
      %v1625 = vadd.f32 %v1623, %v1624
      %v1626 = vrot.slane %v1625, 2
      %v1627 = vadd.f32 %v1625, %v1626
      %v1628 = vrot.slane %v1627, 1
      %v1629 = vadd.f32 %v1627, %v1628
      %v1630 = vadd.f32 %v1606, %v1610
      %v1631 = vadd.f32 %v1630, %v1614
      %v1632 = vadd.f32 %v1631, %v1618
      %v1633 = vrot.slane %v1632, 4
      %v1634 = vadd.f32 %v1632, %v1633
      %v1635 = vrot.slane %v1634, 2
      %v1636 = vadd.f32 %v1634, %v1635
      %v1637 = vrot.slane %v1636, 1
      %v1638 = vadd.f32 %v1636, %v1637
      %v1639 = vadd.f32 %v1607, %v1611
      %v1640 = vadd.f32 %v1639, %v1615
      %v1641 = vadd.f32 %v1640, %v1619
      %v1642 = vrot.slane %v1641, 4
      %v1643 = vadd.f32 %v1641, %v1642
      %v1644 = vrot.slane %v1643, 2
      %v1645 = vadd.f32 %v1643, %v1644
      %v1646 = vrot.slane %v1645, 1
      %v1647 = vadd.f32 %v1645, %v1646
      %v1648 = vadd.f32 %v1608, %v1612
      %v1649 = vadd.f32 %v1648, %v1616
      %v1650 = vadd.f32 %v1649, %v1620
      %v1651 = vrot.slane %v1650, 4
      %v1652 = vadd.f32 %v1650, %v1651
      %v1653 = vrot.slane %v1652, 2
      %v1654 = vadd.f32 %v1652, %v1653
      %v1655 = vrot.slane %v1654, 1
      %v1656 = vadd.f32 %v1654, %v1655
      %v1657 = vld [vmem:[#allocation2] sm:$0x1]
      %1659 = vset.pattern.permute.xlu0 0
      %1660 = vperm.xlu0 %1659, %v1657
      %v1661 = vpop.permute.xlu0 %1660
      %v1663 = vlaneseq
      %v1664 = vshrl.u32 %v1663, 7
      %v1665 = vsub.s32 0, %v1664
      %v1666 = vrot.slane %v1661, %v1665
      %v1667 = vadd.f32 %v1629, %v1666
      %v1668 = vadd.f32 %v1638, %v1666
      %v1669 = vadd.f32 %v1647, %v1666
      %v1670 = vadd.f32 %v1656, %v1666
      %v1675 = vcombine.low %v1667, %v1668
      %v1676 = vcombine.low %v1669, %v1670
      %v1678 = vunpack.c.l.s4 1966171168
      %v1679 = vunpack.c.0.s8 %v1678
      %v1680 = vlaneseq
      %v1681 = vshrl.u32 %v1680, 7
      %v1682 = vsub.s32 %v1679, %v1681
      %v1683 = vrot.slane %v1675, %v1682
      %v1685 = vunpack.c.l.s4 1966171168
      %v1686 = vunpack.c.0.s8 %v1685
      %v1687 = vlaneseq
      %v1688 = vshrl.u32 %v1687, 7
      %v1689 = vsub.s32 %v1686, %v1688
      %v1690 = vrot.slane %v1676, %v1689
      %v1691 = vcombine.low %v1683, %v1690
      %v1693 = vunpack.c.l.s4 1966171168
      %v1694 = vunpack.c.0.s8 %v1693
      %v1695 = vlaneseq
      %v1696 = vshrl.u32 %v1695, 7
      %v1697 = vsub.s32 %v1694, %v1696
      %v1698 = vrot.slane %v1691, %v1697
      %v1700 = vlaneseq
      %vm1701 = vcmp.ge.s32.totalorder %v1700, 0
      %vm1702 = vcmp.lt.s32.totalorder %v1700, 512
      %vm1703 = vmand %vm1701, %vm1702
      %1704 = vst.msk [vmem:[%s334] sm:$0xf] %vm1703, %v1698
      %s1705 = smul.u32 4, %s22
      %p1706 = scmp.lt.s32.totalorder %s1705, 7
      %s1707 = scalar_select %p1706, %s1705, 7
      %s1708 = scalar_lea.vmem %s9, %s1707
      // Predicated region
      $region57: #{mlp_forward.1} parent=55 // pred_check
        %p1709 = pneg %p234
      $region58: #{mlp_forward.1} parent=55 // pred_check_branch
        %1711 = sbr.rel (%p1709) target = $region60
      $region59: #{mlp_forward.1} parent=55 // pred_region
        %s1712 = smul.u32 4, %s22
      $region60: #{mlp_forward.1} parent=55 // pred_fallthru
        _
    $region56: #{mlp_forward.1} parent=5 // pred_fallthru
      _
    %p1713 = scmp.le.s32.totalorder 2, %s17
    // Predicated region
    $region61: #{mlp_forward.1} parent=5 // pred_check
      %p1714 = pneg %p1713
    $region62: #{mlp_forward.1} parent=5 // pred_check_branch
      %1716 = sbr.rel (%p1714) target = $region64
    $region63: #{mlp_forward.1} parent=5 // pred_region
      %s1717 = ssub.s32 %s17, 2
      // Predicated region
      $region65: #{mlp_forward.1} parent=63 // pred_check
        %p1718 = pneg %p240
      $region66: #{mlp_forward.1} parent=63 // pred_check_branch
        %1720 = sbr.rel (%p1718) target = $region68
      $region67: #{mlp_forward.1} parent=63 // pred_region
        %s1721 = smul.u32 4, %s23
        %p1722 = scmp.lt.s32.totalorder %s1721, 7
        %s1723 = scalar_select %p1722, %s1721, 7
        %s1724 = scalar_lea.vmem %s9, %s1723
      $region68: #{mlp_forward.1} parent=63 // pred_fallthru
        _
    $region64: #{mlp_forward.1} parent=5 // pred_fallthru
      _
  $region6: #{mlp_forward.1} parent=0 // loop_footer
    %s21 = sadd.s32 1, %s17
  $region7: #{mlp_forward.1} parent=0 // loop_footer_branch
    %16 = sbr.rel target = $region3
  $region8: #{mlp_forward.1} parent=0 // loop_exit
    _

</llo_original>
